<compile_context>
chip_gen: v7x
topology: tpu7x:2x2x1
jax: 0.10.0
libtpu: 0.0.40
codegen_flags: <defaults>
</compile_context>

<pallas_src>
import jax
import jax.numpy as jnp
from jax.experimental import pallas as pl
from jax.experimental.pallas import tpu as pltpu


def projection_kernel(x_ref, w1_ref, b1_ref, w2_ref, b2_ref, o_ref, h_ref):
    # Per-tile cast of the streamed activation to the weight compute dtype
    # (VPU work, hidden under the MXU/DMA; avoids an extra host-side HBM pass).
    x = x_ref[...].astype(w1_ref.dtype)
    # fc1: MXU matmul with f32 accumulation, f32 bias + ReLU, store in the
    # compute dtype (bf16 on the fast path) -> half the vst/vld between layers.
    h = jnp.dot(x, w1_ref[...], preferred_element_type=jnp.float32)
    h_ref[...] = jnp.maximum(h + b1_ref[...], 0.0).astype(h_ref.dtype)
    # fc2: MXU matmul with f32 accumulation, f32 bias + ReLU, store.
    y = jnp.dot(h_ref[...], w2_ref[...], preferred_element_type=jnp.float32)
    o_ref[...] = jnp.maximum(y + b2_ref[...], 0.0).astype(o_ref.dtype)


def _round_up(x, m):
    return ((x + m - 1) // m) * m


def projection_network(x, w1, b1, w2, b2, *, block_b=512, use_bf16=True,
                       out_dtype=None):
    """Forward pass of ProjectionNetwork.

    x : [B, input_dim]
    w1: [input_dim, hidden]   (nn.Linear weight, pre-transposed)
    b1: [hidden]
    w2: [hidden, output_dim]  (pre-transposed)
    b2: [output_dim]

    For repeated inference, pass w1/w2 already in bf16 so the wrapper cast is a
    no-op (avoids two extra full-weight HBM passes per call).
    """
    B, in_dim = x.shape
    in_dim_w, hidden = w1.shape
    hidden_w, out_dim = w2.shape
    assert in_dim_w == in_dim and hidden_w == hidden

    out_dtype = x.dtype if out_dtype is None else out_dtype
    compute_dtype = jnp.bfloat16 if use_bf16 else jnp.float32

    # Weights: cast only if needed; biases stay f32 for the epilogue.
    w1c = w1 if w1.dtype == compute_dtype else w1.astype(compute_dtype)
    w2c = w2 if w2.dtype == compute_dtype else w2.astype(compute_dtype)
    b1c = b1.reshape(1, hidden).astype(jnp.float32)
    b2c = b2.reshape(1, out_dim).astype(jnp.float32)

    # Lane-pad feature dims to multiples of 128 (no-op for 512/512/256) so the
    # kernel never emits masked vst.msk partial stores. Padded hidden columns
    # are ReLU(0+0)=0 and padded w2 rows are zero, so results are unchanged.
    hidden_p = _round_up(hidden, 128)
    out_p = _round_up(out_dim, 128)
    if hidden_p != hidden:
        w1c = jnp.pad(w1c, ((0, 0), (0, hidden_p - hidden)))
        b1c = jnp.pad(b1c, ((0, 0), (0, hidden_p - hidden)))
        w2c = jnp.pad(w2c, ((0, hidden_p - hidden), (0, 0)))
    if out_p != out_dim:
        w2c = jnp.pad(w2c, ((0, 0), (0, out_p - out_dim)))
        b2c = jnp.pad(b2c, ((0, 0), (0, out_p - out_dim)))

    # Batch tile: big (amortizes ~0.35us per grid step), sublane-aligned, and
    # split into >=2 tiles when B allows so the 'parallel' batch axis can be
    # sharded across v7x's 2 TensorCores. The ragged last tile is masked by
    # Pallas (grid = cdiv), so no host-side pad/slice of x or the output.
    sublane = 16 if compute_dtype == jnp.bfloat16 else 8
    blk = min(block_b, _round_up(pl.cdiv(B, 2), sublane))
    blk = _round_up(max(blk, sublane), sublane)
    grid = (pl.cdiv(B, blk),)

    # VMEM budget: single-buffered resident weights/biases, double-buffered
    # x/out tiles, compute-dtype scratch for h.
    isz = jnp.dtype(compute_dtype).itemsize
    xsz = jnp.dtype(x.dtype).itemsize
    osz = jnp.dtype(out_dtype).itemsize
    weight_bytes = ((in_dim * hidden_p + hidden_p * out_p) * isz
                    + (hidden_p + out_p) * 4)
    vmem_need = (weight_bytes
                 + 2 * blk * in_dim * xsz       # x tile, double-buffered
                 + 2 * blk * out_p * osz        # out tile, double-buffered
                 + blk * hidden_p * isz)        # h scratch (compute dtype)

    try:
        vmem_cap = pltpu.get_tpu_info().vmem_capacity_bytes
    except Exception:
        vmem_cap = 64 << 20                     # conservative: v7x per-TC VMEM
    vmem_budget = int(vmem_cap * 0.85)          # headroom for compiler scratch
    if vmem_need > vmem_budget:
        # TODO(synk): add a K/N-tiled weight path (f32 accumulator scratch,
        # 'arbitrary' reduction axis last) for weights too big to stay resident.
        raise ValueError(
            f"ProjectionNetwork resident weights + tiles need ~{vmem_need >> 20} MiB "
            f"VMEM but the budget is {vmem_budget >> 20} MiB; reduce block_b or "
            f"tile the weights.")
    vmem_limit = min(max(32 << 20, int(1.25 * vmem_need) + (2 << 20)), vmem_budget)

    cost = pl.CostEstimate(
        flops=2 * B * (in_dim * hidden + hidden * out_dim),
        transcendentals=0,
        bytes_accessed=(B * in_dim * xsz + weight_bytes + B * out_dim * osz))

    resident = pl.Buffered(buffer_count=1)  # constant index_map => no double buffer

    out = pl.pallas_call(
        projection_kernel,
        out_shape=jax.ShapeDtypeStruct((B, out_p), out_dtype),
        grid_spec=pltpu.PrefetchScalarGridSpec(
            num_scalar_prefetch=0,
            grid=grid,
            in_specs=[
                pl.BlockSpec((blk, in_dim), lambda i: (i, 0)),        # x streams
                pl.BlockSpec((in_dim, hidden_p), lambda i: (0, 0),
                             pipeline_mode=resident),                  # W1 resident
                pl.BlockSpec((1, hidden_p), lambda i: (0, 0),
                             pipeline_mode=resident),                  # b1 resident
                pl.BlockSpec((hidden_p, out_p), lambda i: (0, 0),
                             pipeline_mode=resident),                  # W2 resident
                pl.BlockSpec((1, out_p), lambda i: (0, 0),
                             pipeline_mode=resident),                  # b2 resident
            ],
            out_specs=pl.BlockSpec((blk, out_p), lambda i: (i, 0)),
            scratch_shapes=[pltpu.VMEM((blk, hidden_p), compute_dtype)],
        ),
        compiler_params=pltpu.CompilerParams(
            dimension_semantics=("parallel",),   # shards batch tiles across TCs
            vmem_limit_bytes=vmem_limit),
        cost_estimate=cost,
    )(x, w1c, b1c, w2c, b2c)

    return out if out_p == out_dim else out[:, :out_dim]


def reference_f32(x, w1, b1, w2, b2):
    hi = jax.lax.Precision.HIGHEST
    h = jnp.maximum(jnp.dot(x, w1, precision=hi) + b1, 0.0)
    return jnp.maximum(jnp.dot(h, w2, precision=hi) + b2, 0.0)


def reference_bf16(x, w1, b1, w2, b2):
    # Mirrors the kernel's bf16 fast path: bf16 operands, f32 accumulation,
    # f32 bias + ReLU, bf16 inter-layer activation.
    h = jnp.dot(x.astype(jnp.bfloat16), w1.astype(jnp.bfloat16),
                preferred_element_type=jnp.float32) + b1
    h = jnp.maximum(h, 0.0).astype(jnp.bfloat16)
    y = jnp.dot(h, w2.astype(jnp.bfloat16),
                preferred_element_type=jnp.float32) + b2
    return jnp.maximum(y, 0.0)


if __name__ == "__main__":
    input_dim, hidden, output_dim = 512, 512, 256   # module defaults
    batch = 40   # ragged batch: exercises cdiv grid, masked last tile, 2-step grid

    key = jax.random.PRNGKey(0)
    kx, k1, kb1, k2, kb2 = jax.random.split(key, 5)

    bound1 = 1.0 / input_dim ** 0.5
    bound2 = 1.0 / hidden ** 0.5
    x = jax.random.normal(kx, (batch, input_dim), dtype=jnp.float32)
    w1 = jax.random.uniform(k1, (input_dim, hidden), jnp.float32, -bound1, bound1)
    b1 = jax.random.uniform(kb1, (hidden,), jnp.float32, -bound1, bound1)
    w2 = jax.random.uniform(k2, (hidden, output_dim), jnp.float32, -bound2, bound2)
    b2 = jax.random.uniform(kb2, (output_dim,), jnp.float32, -bound2, bound2)

    # f32 path with a small tile -> multi-step grid; check against plain JAX.
    out_f32 = jax.block_until_ready(
        projection_network(x, w1, b1, w2, b2, block_b=16, use_bf16=False))
    ref32 = reference_f32(x, w1, b1, w2, b2)
    assert out_f32.shape == (batch, output_dim)
    assert out_f32.dtype == jnp.float32
    assert jnp.allclose(out_f32, ref32, atol=2e-3, rtol=2e-3), "f32 mismatch"

    # bf16 fast path (default): pre-cast weights once (inference pattern) so the
    # wrapper cast is a no-op; f32 activations stream and are cast in-kernel.
    w1_bf = w1.astype(jnp.bfloat16)
    w2_bf = w2.astype(jnp.bfloat16)
    out_bf = jax.block_until_ready(
        projection_network(x, w1_bf, b1, w2_bf, b2))
    refbf = reference_bf16(x, w1, b1, w2, b2)
    assert out_bf.shape == (batch, output_dim)
    assert out_bf.dtype == jnp.float32
    assert jnp.allclose(out_bf, refbf, atol=2e-2, rtol=2e-2), "bf16 mismatch"

    print("KERNEL_OK")
</pallas_src>

<mosaic_0001>
module attributes {stable_mosaic.version = 11 : i64} {
  func.func @projection_kernel(%arg0: i32, %arg1: memref<16x512xf32, #tpu.memory_space<vmem>>, %arg2: memref<512x512xf32, #tpu.memory_space<vmem>>, %arg3: memref<1x512xf32, #tpu.memory_space<vmem>>, %arg4: memref<512x256xf32, #tpu.memory_space<vmem>>, %arg5: memref<1x256xf32, #tpu.memory_space<vmem>>, %arg6: memref<16x256xf32, #tpu.memory_space<vmem>>, %arg7: memref<16x512xf32, #tpu.memory_space<vmem>>) attributes {dimension_semantics = [#tpu.dimension_semantics<parallel>], iteration_bounds = array<i64: 3>, scalar_prefetch = 0 : i64, scratch_operands = 1 : i64, tpu.core_type = #tpu.core_type<tc>, window_params = [{transform_indices = @transform_0, window_bounds = array<i64: 16, 512>}, {pipeline_mode = #tpu.pipeline_mode<synchronous>, transform_indices = @transform_1, window_bounds = array<i64: 512, 512>}, {pipeline_mode = #tpu.pipeline_mode<synchronous>, transform_indices = @transform_2, window_bounds = array<i64: 1, 512>}, {pipeline_mode = #tpu.pipeline_mode<synchronous>, transform_indices = @transform_3, window_bounds = array<i64: 512, 256>}, {pipeline_mode = #tpu.pipeline_mode<synchronous>, transform_indices = @transform_4, window_bounds = array<i64: 1, 256>}, {transform_indices = @transform_5, window_bounds = array<i64: 16, 256>}]} {
    %c0 = arith.constant 0 : index
    %c0_0 = arith.constant 0 : index
    %0 = vector.load %arg1[%c0, %c0_0] : memref<16x512xf32, #tpu.memory_space<vmem>>, vector<16x512xf32>
    %c0_1 = arith.constant 0 : index
    %c0_2 = arith.constant 0 : index
    %1 = vector.load %arg2[%c0_1, %c0_2] : memref<512x512xf32, #tpu.memory_space<vmem>>, vector<512x512xf32>
    %cst = arith.constant dense<0.000000e+00> : vector<16x512xf32>
    %2 = tpu.matmul %0, %1, %cst {dimension_numbers = #tpu.dot_dimension_numbers<[1], [0], [0], [1], [0, 0, 1, 1], [], []>} : vector<16x512xf32>, vector<512x512xf32>, vector<16x512xf32> -> vector<16x512xf32>
    %c0_3 = arith.constant 0 : index
    %c0_4 = arith.constant 0 : index
    %3 = vector.load %arg3[%c0_3, %c0_4] : memref<1x512xf32, #tpu.memory_space<vmem>>, vector<1x512xf32>
    %4 = vector.broadcast %3 : vector<1x512xf32> to vector<16x512xf32>
    %5 = arith.addf %2, %4 : vector<16x512xf32>
    %cst_5 = arith.constant 0.000000e+00 : f32
    %6 = vector.broadcast %cst_5 : f32 to vector<16x512xf32>
    %7 = arith.maximumf %5, %6 : vector<16x512xf32>
    %c0_6 = arith.constant 0 : index
    %c0_7 = arith.constant 0 : index
    %8 = vector.load %arg7[%c0_6, %c0_7] : memref<16x512xf32, #tpu.memory_space<vmem>>, vector<16x512xf32>
    tpu.vector_store %arg7[%c0_6, %c0_7], %7 {strides = array<i32>} : memref<16x512xf32, #tpu.memory_space<vmem>>, vector<16x512xf32>,
    %c0_8 = arith.constant 0 : index
    %c0_9 = arith.constant 0 : index
    %9 = vector.load %arg7[%c0_8, %c0_9] : memref<16x512xf32, #tpu.memory_space<vmem>>, vector<16x512xf32>
    %c0_10 = arith.constant 0 : index
    %c0_11 = arith.constant 0 : index
    %10 = vector.load %arg4[%c0_10, %c0_11] : memref<512x256xf32, #tpu.memory_space<vmem>>, vector<512x256xf32>
    %cst_12 = arith.constant dense<0.000000e+00> : vector<16x256xf32>
    %11 = tpu.matmul %9, %10, %cst_12 {dimension_numbers = #tpu.dot_dimension_numbers<[1], [0], [0], [1], [0, 0, 1, 1], [], []>} : vector<16x512xf32>, vector<512x256xf32>, vector<16x256xf32> -> vector<16x256xf32>
    %c0_13 = arith.constant 0 : index
    %c0_14 = arith.constant 0 : index
    %12 = vector.load %arg5[%c0_13, %c0_14] : memref<1x256xf32, #tpu.memory_space<vmem>>, vector<1x256xf32>
    %13 = vector.broadcast %12 : vector<1x256xf32> to vector<16x256xf32>
    %14 = arith.addf %11, %13 : vector<16x256xf32>
    %cst_15 = arith.constant 0.000000e+00 : f32
    %15 = vector.broadcast %cst_15 : f32 to vector<16x256xf32>
    %16 = arith.maximumf %14, %15 : vector<16x256xf32>
    %c0_16 = arith.constant 0 : index
    %c0_17 = arith.constant 0 : index
    %17 = vector.load %arg6[%c0_16, %c0_17] : memref<16x256xf32, #tpu.memory_space<vmem>>, vector<16x256xf32>
    tpu.vector_store %arg6[%c0_16, %c0_17], %16 {strides = array<i32>} : memref<16x256xf32, #tpu.memory_space<vmem>>, vector<16x256xf32>,
    return
  }
  func.func @transform_0(%arg0: i32) -> (i32, i32) {
    %c0_i32 = arith.constant 0 : i32
    %c0_i32_0 = arith.constant 0 : i32
    return %arg0, %c0_i32 : i32, i32
  }
  func.func @transform_1(%arg0: i32) -> (i32, i32) {
    %c0_i32 = arith.constant 0 : i32
    %c0_i32_0 = arith.constant 0 : i32
    %c0_i32_1 = arith.constant 0 : i32
    return %c0_i32, %c0_i32_0 : i32, i32
  }
  func.func @transform_2(%arg0: i32) -> (i32, i32) {
    %c0_i32 = arith.constant 0 : i32
    %c0_i32_0 = arith.constant 0 : i32
    %c0_i32_1 = arith.constant 0 : i32
    return %c0_i32, %c0_i32_0 : i32, i32
  }
  func.func @transform_3(%arg0: i32) -> (i32, i32) {
    %c0_i32 = arith.constant 0 : i32
    %c0_i32_0 = arith.constant 0 : i32
    %c0_i32_1 = arith.constant 0 : i32
    return %c0_i32, %c0_i32_0 : i32, i32
  }
  func.func @transform_4(%arg0: i32) -> (i32, i32) {
    %c0_i32 = arith.constant 0 : i32
    %c0_i32_0 = arith.constant 0 : i32
    %c0_i32_1 = arith.constant 0 : i32
    return %c0_i32, %c0_i32_0 : i32, i32
  }
  func.func @transform_5(%arg0: i32) -> (i32, i32) {
    %c0_i32 = arith.constant 0 : i32
    %c0_i32_0 = arith.constant 0 : i32
    return %arg0, %c0_i32 : i32, i32
  }
}

</mosaic_0001>

<llo_original>
// kernel: tpu_custom_call.1
$region0: #{tpu_custom_call.1}
  #allocation0 [shape = 'u32[]', space=smem, size = 0x4, offset = 0x4, fixed_abs, tag = 'smem constant byte address 0x4 - core index']
  #allocation1 [shape = 'u32[144,128]{1,0:T(1,128)}', space=vmem, size = 0x12000, scoped, tag = 'internal scratch']
  #allocation2 [shape = 'f32[16,512]{1,0:T(8,128)}', space=vmem, size = 0x8000, scoped, tag = 'scratch operand']
  %s0 = inlined_call_operand.hbm [shape: f32[40,512], index: 0, kind: input, shape index: {}]
  %s1 = inlined_call_operand.hbm [shape: f32[512,512], index: 1, kind: input, shape index: {}]
  %s2 = inlined_call_operand.vmem [shape: f32[1,512], index: 2, kind: input, shape index: {}]
  %s3 = inlined_call_operand.hbm [shape: f32[512,256], index: 3, kind: input, shape index: {}]
  %s4 = inlined_call_operand.vmem [shape: f32[1,256], index: 4, kind: input, shape index: {}]
  %s5 = inlined_call_operand.hbm [shape: f32[40,256], index: 5, kind: output, shape index: {}]
  %s6 = sld [smem:[#allocation0]]
  $region65: #{tpu_custom_call.1} parent=0
    _
  %s8 = ssub.s32 1, %s6
  %s9 = scalar_select 0, %s8, %s6
  $region1: #{tpu_custom_call.1} parent=0
    #allocation3 [shape = 'u8[65536]{0}', space=vmem, size = 0x10000, scoped, tag = 'input window, operand 0']
    #allocation4 [shape = 's32[2]{0}', space=sflag, size = 0x8, scoped, tag = 'scoped memory for tpu_custom_call.1']
    #allocation5 [shape = 's32[2]{0}', space=sflag, size = 0x8, scoped, tag = 'scoped memory for tpu_custom_call.1']
    #allocation6 [shape = 'u8[1048576]{0}', space=vmem, size = 0x100000, scoped, tag = 'input window, operand 1, single buffered']
    #allocation7 [shape = 's32[1]{0}', space=sflag, size = 0x4, scoped, tag = 'scoped memory for tpu_custom_call.1']
    #allocation8 [shape = 'u8[524288]{0}', space=vmem, size = 0x80000, scoped, tag = 'input window, operand 3, single buffered']
    #allocation9 [shape = 'u8[32768]{0}', space=vmem, size = 0x8000, scoped, tag = 'output window, operand 0']
    %10 = vsyncpa [#allocation4], 0
    %s11 = scalar_lea.sflag [#allocation4], 1
    %12 = vsyncpa %s11, 0
    %13 = vsyncpa [#allocation7], 0
    %14 = vsyncpa [#allocation5], 0
    %s15 = scalar_lea.sflag [#allocation5], 1
    %16 = vsyncpa %s15, 0
    loop: start=0, step=1, limit=5
    $region2: #{tpu_custom_call.1} parent=1 // loop_pre_header
      _
    $region3: #{tpu_custom_call.1} parent=1 // loop_header
      %s18 = sphi 0, %s22
      %p19 = scmp.ge.s32.totalorder %s18, 5
      %s28 = sphi 0, %s30
      %s31 = sphi 0, %s28
      %s32 = sphi 0, %s31
      %s48 = sphi 0, %s32
      %s52 = sphi 0, %s52
      %s54 = sphi 0, %s52
      %s55 = sphi 0, %s54
      %s69 = sphi 0, %s55
      %s73 = sphi 0, %s73
      %s75 = sphi 0, %s73
      %s76 = sphi 0, %s75
      %s90 = sphi 0, %s76
      %s94 = sphi 0, %s94
      %s96 = sphi 0, %s94
      %s97 = sphi 0, %s96
      %s111 = sphi 0, %s97
      %s115 = sphi 0, %s115
      %s117 = sphi 0, %s115
      %s118 = sphi 0, %s117
      %s132 = sphi 0, %s118
      %s138 = sphi 0, %s140
      %s141 = sphi 0, %s138
      %s142 = sphi 0, %s141
      %s158 = sphi 0, %s142
    $region4: #{tpu_custom_call.1} parent=1 // loop_header_branch
      %21 = sbr.rel (%p19) target = $region8
    $region5: #{tpu_custom_call.1} parent=1 // loop_body
      %s23 = ssub.s32 %s18, 1
      %s24 = ssub.s32 %s18, 2
      %s25 = sadd.s32 %s18, 1
      %s26 = ssub.s32 %s18, %s25
      %p27 = scmp.eq.s32.totalorder %s26, 0
      %s29 = sadd.s32 %s28, 1
      %s30 = scalar_select %p27, %s28, %s29
      %p33 = pneg %p27
      %p34 = scmp.eq.s32.totalorder %s18, 2
      %p35 = por %p33, %p34
      %p36 = scmp.ne.s32.totalorder %s28, %s31
      %p37 = scmp.eq.s32.totalorder %s18, 0
      %p38 = por %p36, %p37
      %p39 = scmp.ne.s32.totalorder %s28, %s31
      %p40 = scmp.eq.s32.totalorder %s23, 2
      %p41 = por %p39, %p40
      %p42 = scmp.ne.s32.totalorder %s31, %s32
      %p43 = scmp.eq.s32.totalorder %s23, 0
      %p44 = por %p42, %p43
      %p45 = scmp.ne.s32.totalorder %s31, %s32
      %p46 = scmp.eq.s32.totalorder %s24, 2
      %p47 = por %p45, %p46
      %p49 = scmp.ne.s32.totalorder %s32, %s48
      %p50 = scmp.eq.s32.totalorder %s24, 0
      %p51 = por %p49, %p50
      %s53 = sadd.s32 %s52, 1
      %p56 = scmp.eq.s32.totalorder %s18, 2
      %p57 = scmp.ne.s32.totalorder %s52, %s54
      %p58 = scmp.eq.s32.totalorder %s18, 0
      %p59 = por %p57, %p58
      %p60 = scmp.ne.s32.totalorder %s52, %s54
      %p61 = scmp.eq.s32.totalorder %s23, 2
      %p62 = por %p60, %p61
      %p63 = scmp.ne.s32.totalorder %s54, %s55
      %p64 = scmp.eq.s32.totalorder %s23, 0
      %p65 = por %p63, %p64
      %p66 = scmp.ne.s32.totalorder %s54, %s55
      %p67 = scmp.eq.s32.totalorder %s24, 2
      %p68 = por %p66, %p67
      %p70 = scmp.ne.s32.totalorder %s55, %s69
      %p71 = scmp.eq.s32.totalorder %s24, 0
      %p72 = por %p70, %p71
      %s74 = sadd.s32 %s73, 1
      %p77 = scmp.eq.s32.totalorder %s18, 2
      %p78 = scmp.ne.s32.totalorder %s73, %s75
      %p79 = scmp.eq.s32.totalorder %s18, 0
      %p80 = por %p78, %p79
      %p81 = scmp.ne.s32.totalorder %s73, %s75
      %p82 = scmp.eq.s32.totalorder %s23, 2
      %p83 = por %p81, %p82
      %p84 = scmp.ne.s32.totalorder %s75, %s76
      %p85 = scmp.eq.s32.totalorder %s23, 0
      %p86 = por %p84, %p85
      %p87 = scmp.ne.s32.totalorder %s75, %s76
      %p88 = scmp.eq.s32.totalorder %s24, 2
      %p89 = por %p87, %p88
      %p91 = scmp.ne.s32.totalorder %s76, %s90
      %p92 = scmp.eq.s32.totalorder %s24, 0
      %p93 = por %p91, %p92
      %s95 = sadd.s32 %s94, 1
      %p98 = scmp.eq.s32.totalorder %s18, 2
      %p99 = scmp.ne.s32.totalorder %s94, %s96
      %p100 = scmp.eq.s32.totalorder %s18, 0
      %p101 = por %p99, %p100
      %p102 = scmp.ne.s32.totalorder %s94, %s96
      %p103 = scmp.eq.s32.totalorder %s23, 2
      %p104 = por %p102, %p103
      %p105 = scmp.ne.s32.totalorder %s96, %s97
      %p106 = scmp.eq.s32.totalorder %s23, 0
      %p107 = por %p105, %p106
      %p108 = scmp.ne.s32.totalorder %s96, %s97
      %p109 = scmp.eq.s32.totalorder %s24, 2
      %p110 = por %p108, %p109
      %p112 = scmp.ne.s32.totalorder %s97, %s111
      %p113 = scmp.eq.s32.totalorder %s24, 0
      %p114 = por %p112, %p113
      %s116 = sadd.s32 %s115, 1
      %p119 = scmp.eq.s32.totalorder %s18, 2
      %p120 = scmp.ne.s32.totalorder %s115, %s117
      %p121 = scmp.eq.s32.totalorder %s18, 0
      %p122 = por %p120, %p121
      %p123 = scmp.ne.s32.totalorder %s115, %s117
      %p124 = scmp.eq.s32.totalorder %s23, 2
      %p125 = por %p123, %p124
      %p126 = scmp.ne.s32.totalorder %s117, %s118
      %p127 = scmp.eq.s32.totalorder %s23, 0
      %p128 = por %p126, %p127
      %p129 = scmp.ne.s32.totalorder %s117, %s118
      %p130 = scmp.eq.s32.totalorder %s24, 2
      %p131 = por %p129, %p130
      %p133 = scmp.ne.s32.totalorder %s118, %s132
      %p134 = scmp.eq.s32.totalorder %s24, 0
      %p135 = por %p133, %p134
      %s136 = ssub.s32 %s18, %s25
      %p137 = scmp.eq.s32.totalorder %s136, 0
      %s139 = sadd.s32 %s138, 1
      %s140 = scalar_select %p137, %s138, %s139
      %p143 = pneg %p137
      %p144 = scmp.eq.s32.totalorder %s18, 2
      %p145 = por %p143, %p144
      %p146 = scmp.ne.s32.totalorder %s138, %s141
      %p147 = scmp.eq.s32.totalorder %s18, 0
      %p148 = por %p146, %p147
      %p149 = scmp.ne.s32.totalorder %s138, %s141
      %p150 = scmp.eq.s32.totalorder %s23, 2
      %p151 = por %p149, %p150
      %p152 = scmp.ne.s32.totalorder %s141, %s142
      %p153 = scmp.eq.s32.totalorder %s23, 0
      %p154 = por %p152, %p153
      %p155 = scmp.ne.s32.totalorder %s141, %s142
      %p156 = scmp.eq.s32.totalorder %s24, 2
      %p157 = por %p155, %p156
      %p159 = scmp.ne.s32.totalorder %s142, %s158
      %p160 = scmp.eq.s32.totalorder %s24, 0
      %p161 = por %p159, %p160
      %p162 = scmp.le.s32.totalorder 1, %s18
      %p163 = scmp.lt.s32.totalorder %s18, 4
      %p164 = pnand %p162, %p163
      %p165 = pneg %p164
      // Predicated region
      $region9: #{tpu_custom_call.1} parent=5 // pred_check
        _
      $region10: #{tpu_custom_call.1} parent=5 // pred_check_branch
        %167 = sbr.rel (%p164) target = $region12
      $region11: #{tpu_custom_call.1} parent=5 // pred_region
        %s168 = ssub.s32 %s18, 1
        // Predicated region
        $region13: #{tpu_custom_call.1} parent=11 // pred_check
          %p169 = pneg %p65
        $region14: #{tpu_custom_call.1} parent=11 // pred_check_branch
          %171 = sbr.rel (%p169) target = $region16
        $region15: #{tpu_custom_call.1} parent=11 // pred_region
          %s173 = ssub.s32 32768, 32768
          %174 = vsyncadd [#allocation7], %s173
          %s175 = sshll.u32 [#allocation6], 4
          %s176 = int_to_ptr.vmem [resolvable:$true] %s175
          %181 = dma.hbm_to_vmem [thread:$0]  %s1, 32768, %s176, [#allocation7], 512, 512, 32
        $region16: #{tpu_custom_call.1} parent=11 // pred_fallthru
          _
        // Predicated region
        $region17: #{tpu_custom_call.1} parent=11 // pred_check
          %p182 = pneg %p86
        $region18: #{tpu_custom_call.1} parent=11 // pred_check_branch
          %184 = sbr.rel (%p182) target = $region20
        $region19: #{tpu_custom_call.1} parent=11 // pred_region
          _
        $region20: #{tpu_custom_call.1} parent=11 // pred_fallthru
          _
        // Predicated region
        $region21: #{tpu_custom_call.1} parent=11 // pred_check
          %p185 = pneg %p107
        $region22: #{tpu_custom_call.1} parent=11 // pred_check_branch
          %187 = sbr.rel (%p185) target = $region24
        $region23: #{tpu_custom_call.1} parent=11 // pred_region
          %s189 = ssub.s32 16384, 16384
          %190 = vsyncadd [#allocation7], %s189
          %s191 = sshll.u32 [#allocation8], 4
          %s192 = int_to_ptr.vmem [resolvable:$true] %s191
          %197 = dma.hbm_to_vmem [thread:$0]  %s3, 16384, %s192, [#allocation7], 256, 256, 16
        $region24: #{tpu_custom_call.1} parent=11 // pred_fallthru
          _
        // Predicated region
        $region25: #{tpu_custom_call.1} parent=11 // pred_check
          %p198 = pneg %p128
        $region26: #{tpu_custom_call.1} parent=11 // pred_check_branch
          %200 = sbr.rel (%p198) target = $region28
        $region27: #{tpu_custom_call.1} parent=11 // pred_region
          _
        $region28: #{tpu_custom_call.1} parent=11 // pred_fallthru
          _
      $region12: #{tpu_custom_call.1} parent=5 // pred_fallthru
        _
      %p201 = scmp.lt.s32.totalorder %s18, 3
      // Predicated region
      $region29: #{tpu_custom_call.1} parent=5 // pred_check
        %p202 = pneg %p201
      $region30: #{tpu_custom_call.1} parent=5 // pred_check_branch
        %204 = sbr.rel (%p202) target = $region32
      $region31: #{tpu_custom_call.1} parent=5 // pred_region
        // Predicated region
        $region33: #{tpu_custom_call.1} parent=31 // pred_check
          %p205 = pneg %p38
        $region34: #{tpu_custom_call.1} parent=31 // pred_check_branch
          %207 = sbr.rel (%p205) target = $region36
        $region35: #{tpu_custom_call.1} parent=31 // pred_region
          %s208 = sand.u32 %s28, 1
          %s209 = scalar_lea.sflag [#allocation4], %s208
          %s210 = sand.u32 %s28, 1
          %s211 = smul.addr %s210, 64
          %s212 = scalar_lea.vmem [#allocation3], %s211
          %s213 = smul.u32 2, %s18
          %s214 = ssub.s32 5, %s213
          %p215 = scmp.lt.s32.totalorder %s214, 2
          %s216 = scalar_select %p215, %s214, 2
          %s217 = smul.u32 128, %s216
          %s218 = smul.u32 %s217, 4
          %s220 = ssub.s32 1024, %s218
          %221 = vsyncadd %s209, %s220
          %p222 = scmp.ne.s32.totalorder 0, %s218
          %s223 = smul.addr %s213, 4
          %s224 = smul.addr %s223, 128
          %s225 = scalar_lea.hbm %s0, %s224
          %s226 = smul.u32 32, %s216
          %s227 = sshll.u32 %s212, 4
          %s228 = int_to_ptr.vmem [resolvable:$true] %s227
          %s229 = sshll.u32 %s226, 4
          %233 = dma.hbm_to_vmem [thread:$0]  (%p222), %s225, %s229, %s228, %s209, 512, 512, 32
        $region36: #{tpu_custom_call.1} parent=31 // pred_fallthru
          _
      $region32: #{tpu_custom_call.1} parent=5 // pred_fallthru
        _
      %p234 = scmp.le.s32.totalorder 1, %s18
      %p235 = scmp.lt.s32.totalorder %s18, 4
      %p236 = pnand %p234, %p235
      %p237 = pneg %p236
      // Predicated region
      $region37: #{tpu_custom_call.1} parent=5 // pred_check
        _
      $region38: #{tpu_custom_call.1} parent=5 // pred_check_branch
        %239 = sbr.rel (%p236) target = $region40
      $region39: #{tpu_custom_call.1} parent=5 // pred_region
        %s240 = ssub.s32 %s18, 1
        %s241 = sand.u32 %s31, 1
        %s242 = scalar_lea.sflag [#allocation4], %s241
        %s243 = sand.u32 %s31, 1
        %s244 = smul.addr %s243, 64
        %s245 = scalar_lea.vmem [#allocation3], %s244
        // Predicated region
        $region41: #{tpu_custom_call.1} parent=39 // pred_check
          %p246 = pneg %p44
        $region42: #{tpu_custom_call.1} parent=39 // pred_check_branch
          %248 = sbr.rel (%p246) target = $region44
        $region43: #{tpu_custom_call.1} parent=39 // pred_region
          %249 = dma.done %s242, 1024
        $region44: #{tpu_custom_call.1} parent=39 // pred_fallthru
          _
        // Predicated region
        $region45: #{tpu_custom_call.1} parent=39 // pred_check
          %p250 = pneg %p65
        $region46: #{tpu_custom_call.1} parent=39 // pred_check_branch
          %252 = sbr.rel (%p250) target = $region48
        $region47: #{tpu_custom_call.1} parent=39 // pred_region
          %253 = dma.done [#allocation7], 32768
        $region48: #{tpu_custom_call.1} parent=39 // pred_fallthru
          _
        // Predicated region
        $region49: #{tpu_custom_call.1} parent=39 // pred_check
          %p254 = pneg %p107
        $region50: #{tpu_custom_call.1} parent=39 // pred_check_branch
          %256 = sbr.rel (%p254) target = $region52
        $region51: #{tpu_custom_call.1} parent=39 // pred_region
          %257 = dma.done [#allocation7], 16384
        $region52: #{tpu_custom_call.1} parent=39 // pred_fallthru
          _
        %s258 = sand.u32 %s31, 1
        %s259 = scalar_lea.sflag [#allocation4], %s258
        %s260 = sand.u32 %s31, 1
        %s261 = smul.addr %s260, 64
        %s262 = scalar_lea.vmem [#allocation3], %s261
        %p263 = pneg %p44
        %p264 = pneg %p41
        %p265 = pneg %p65
        %p266 = pneg %p62
        %p267 = pneg %p86
        %p268 = pneg %p83
        %p269 = pneg %p107
        %p270 = pneg %p104
        %p271 = pneg %p128
        %p272 = pneg %p125
        %p273 = pneg %p154
        %p274 = pneg %p151
        %s275 = sand.u32 %s141, 1
        %s276 = scalar_lea.sflag [#allocation5], %s275
        %s277 = sand.u32 %s141, 1
        %s278 = smul.addr %s277, 32
        %s279 = scalar_lea.vmem [#allocation9], %s278
        %s280 = smul.u32 2, %s23
        %s281 = ssub.s32 5, %s280
        %p282 = scmp.lt.s32.totalorder %s281, 2
        %s283 = scalar_select %p282, %s281, 2
        %s284 = smul.u32 128, %s283
        %s285 = smul.u32 %s284, 4
        %s286 = smul.u32 2, %s23
        %s287 = ssub.s32 5, %s286
        %p288 = scmp.lt.s32.totalorder %s287, 2
        %s289 = scalar_select %p288, %s287, 2
        %s290 = smul.u32 128, %s289
        %s291 = smul.u32 %s290, 2
        %v292 = vld [vmem:[%s245] sm:$0xff]
        %v293 = vld [vmem:[%s245 + $0x8] sm:$0xff]
        %v294 = vld [vmem:[%s245 + $0x10] sm:$0xff]
        %v295 = vld [vmem:[%s245 + $0x18] sm:$0xff]
        %v296 = vld [vmem:[%s245 + $0x20] sm:$0xff]
        %v297 = vld [vmem:[%s245 + $0x28] sm:$0xff]
        %v298 = vld [vmem:[%s245 + $0x30] sm:$0xff]
        %v299 = vld [vmem:[%s245 + $0x38] sm:$0xff]
        %v300 = vld [vmem:[#allocation6] sm:$0xff]
        %v301 = vld [vmem:[#allocation6 + $0x8] sm:$0xff]
        %v302 = vld [vmem:[#allocation6 + $0x10] sm:$0xff]
        %v303 = vld [vmem:[#allocation6 + $0x18] sm:$0xff]
        %v304 = vld [vmem:[#allocation6 + $0x20] sm:$0xff]
        %v305 = vld [vmem:[#allocation6 + $0x28] sm:$0xff]
        %v306 = vld [vmem:[#allocation6 + $0x30] sm:$0xff]
        %v307 = vld [vmem:[#allocation6 + $0x38] sm:$0xff]
        %v308 = vld [vmem:[#allocation6 + $0x40] sm:$0xff]
        %v309 = vld [vmem:[#allocation6 + $0x48] sm:$0xff]
        %v310 = vld [vmem:[#allocation6 + $0x50] sm:$0xff]
        %v311 = vld [vmem:[#allocation6 + $0x58] sm:$0xff]
        %v312 = vld [vmem:[#allocation6 + $0x60] sm:$0xff]
        %v313 = vld [vmem:[#allocation6 + $0x68] sm:$0xff]
        %v314 = vld [vmem:[#allocation6 + $0x70] sm:$0xff]
        %v315 = vld [vmem:[#allocation6 + $0x78] sm:$0xff]
        %v316 = vld [vmem:[#allocation6 + $0x80] sm:$0xff]
        %v317 = vld [vmem:[#allocation6 + $0x88] sm:$0xff]
        %v318 = vld [vmem:[#allocation6 + $0x90] sm:$0xff]
        %v319 = vld [vmem:[#allocation6 + $0x98] sm:$0xff]
        %v320 = vld [vmem:[#allocation6 + $0xa0] sm:$0xff]
        %v321 = vld [vmem:[#allocation6 + $0xa8] sm:$0xff]
        %v322 = vld [vmem:[#allocation6 + $0xb0] sm:$0xff]
        %v323 = vld [vmem:[#allocation6 + $0xb8] sm:$0xff]
        %v324 = vld [vmem:[#allocation6 + $0xc0] sm:$0xff]
        %v325 = vld [vmem:[#allocation6 + $0xc8] sm:$0xff]
        %v326 = vld [vmem:[#allocation6 + $0xd0] sm:$0xff]
        %v327 = vld [vmem:[#allocation6 + $0xd8] sm:$0xff]
        %v328 = vld [vmem:[#allocation6 + $0xe0] sm:$0xff]
        %v329 = vld [vmem:[#allocation6 + $0xe8] sm:$0xff]
        %v330 = vld [vmem:[#allocation6 + $0xf0] sm:$0xff]
        %v331 = vld [vmem:[#allocation6 + $0xf8] sm:$0xff]
        %v332 = vld [vmem:[#allocation6 + $0x100] sm:$0xff]
        %v333 = vld [vmem:[#allocation6 + $0x108] sm:$0xff]
        %v334 = vld [vmem:[#allocation6 + $0x110] sm:$0xff]
        %v335 = vld [vmem:[#allocation6 + $0x118] sm:$0xff]
        %v336 = vld [vmem:[#allocation6 + $0x120] sm:$0xff]
        %v337 = vld [vmem:[#allocation6 + $0x128] sm:$0xff]
        %v338 = vld [vmem:[#allocation6 + $0x130] sm:$0xff]
        %v339 = vld [vmem:[#allocation6 + $0x138] sm:$0xff]
        %v340 = vld [vmem:[#allocation6 + $0x140] sm:$0xff]
        %v341 = vld [vmem:[#allocation6 + $0x148] sm:$0xff]
        %v342 = vld [vmem:[#allocation6 + $0x150] sm:$0xff]
        %v343 = vld [vmem:[#allocation6 + $0x158] sm:$0xff]
        %v344 = vld [vmem:[#allocation6 + $0x160] sm:$0xff]
        %v345 = vld [vmem:[#allocation6 + $0x168] sm:$0xff]
        %v346 = vld [vmem:[#allocation6 + $0x170] sm:$0xff]
        %v347 = vld [vmem:[#allocation6 + $0x178] sm:$0xff]
        %v348 = vld [vmem:[#allocation6 + $0x180] sm:$0xff]
        %v349 = vld [vmem:[#allocation6 + $0x188] sm:$0xff]
        %v350 = vld [vmem:[#allocation6 + $0x190] sm:$0xff]
        %v351 = vld [vmem:[#allocation6 + $0x198] sm:$0xff]
        %v352 = vld [vmem:[#allocation6 + $0x1a0] sm:$0xff]
        %v353 = vld [vmem:[#allocation6 + $0x1a8] sm:$0xff]
        %v354 = vld [vmem:[#allocation6 + $0x1b0] sm:$0xff]
        %v355 = vld [vmem:[#allocation6 + $0x1b8] sm:$0xff]
        %v356 = vld [vmem:[#allocation6 + $0x1c0] sm:$0xff]
        %v357 = vld [vmem:[#allocation6 + $0x1c8] sm:$0xff]
        %v358 = vld [vmem:[#allocation6 + $0x1d0] sm:$0xff]
        %v359 = vld [vmem:[#allocation6 + $0x1d8] sm:$0xff]
        %v360 = vld [vmem:[#allocation6 + $0x1e0] sm:$0xff]
        %v361 = vld [vmem:[#allocation6 + $0x1e8] sm:$0xff]
        %v362 = vld [vmem:[#allocation6 + $0x1f0] sm:$0xff]
        %v363 = vld [vmem:[#allocation6 + $0x1f8] sm:$0xff]
        %v364 = vld [vmem:[#allocation6 + $0x200] sm:$0xff]
        %v365 = vld [vmem:[#allocation6 + $0x208] sm:$0xff]
        %v366 = vld [vmem:[#allocation6 + $0x210] sm:$0xff]
        %v367 = vld [vmem:[#allocation6 + $0x218] sm:$0xff]
        %v368 = vld [vmem:[#allocation6 + $0x220] sm:$0xff]
        %v369 = vld [vmem:[#allocation6 + $0x228] sm:$0xff]
        %v370 = vld [vmem:[#allocation6 + $0x230] sm:$0xff]
        %v371 = vld [vmem:[#allocation6 + $0x238] sm:$0xff]
        %v372 = vld [vmem:[#allocation6 + $0x240] sm:$0xff]
        %v373 = vld [vmem:[#allocation6 + $0x248] sm:$0xff]
        %v374 = vld [vmem:[#allocation6 + $0x250] sm:$0xff]
        %v375 = vld [vmem:[#allocation6 + $0x258] sm:$0xff]
        %v376 = vld [vmem:[#allocation6 + $0x260] sm:$0xff]
        %v377 = vld [vmem:[#allocation6 + $0x268] sm:$0xff]
        %v378 = vld [vmem:[#allocation6 + $0x270] sm:$0xff]
        %v379 = vld [vmem:[#allocation6 + $0x278] sm:$0xff]
        %v380 = vld [vmem:[#allocation6 + $0x280] sm:$0xff]
        %v381 = vld [vmem:[#allocation6 + $0x288] sm:$0xff]
        %v382 = vld [vmem:[#allocation6 + $0x290] sm:$0xff]
        %v383 = vld [vmem:[#allocation6 + $0x298] sm:$0xff]
        %v384 = vld [vmem:[#allocation6 + $0x2a0] sm:$0xff]
        %v385 = vld [vmem:[#allocation6 + $0x2a8] sm:$0xff]
        %v386 = vld [vmem:[#allocation6 + $0x2b0] sm:$0xff]
        %v387 = vld [vmem:[#allocation6 + $0x2b8] sm:$0xff]
        %v388 = vld [vmem:[#allocation6 + $0x2c0] sm:$0xff]
        %v389 = vld [vmem:[#allocation6 + $0x2c8] sm:$0xff]
        %v390 = vld [vmem:[#allocation6 + $0x2d0] sm:$0xff]
        %v391 = vld [vmem:[#allocation6 + $0x2d8] sm:$0xff]
        %v392 = vld [vmem:[#allocation6 + $0x2e0] sm:$0xff]
        %v393 = vld [vmem:[#allocation6 + $0x2e8] sm:$0xff]
        %v394 = vld [vmem:[#allocation6 + $0x2f0] sm:$0xff]
        %v395 = vld [vmem:[#allocation6 + $0x2f8] sm:$0xff]
        %v396 = vld [vmem:[#allocation6 + $0x300] sm:$0xff]
        %v397 = vld [vmem:[#allocation6 + $0x308] sm:$0xff]
        %v398 = vld [vmem:[#allocation6 + $0x310] sm:$0xff]
        %v399 = vld [vmem:[#allocation6 + $0x318] sm:$0xff]
        %v400 = vld [vmem:[#allocation6 + $0x320] sm:$0xff]
        %v401 = vld [vmem:[#allocation6 + $0x328] sm:$0xff]
        %v402 = vld [vmem:[#allocation6 + $0x330] sm:$0xff]
        %v403 = vld [vmem:[#allocation6 + $0x338] sm:$0xff]
        %v404 = vld [vmem:[#allocation6 + $0x340] sm:$0xff]
        %v405 = vld [vmem:[#allocation6 + $0x348] sm:$0xff]
        %v406 = vld [vmem:[#allocation6 + $0x350] sm:$0xff]
        %v407 = vld [vmem:[#allocation6 + $0x358] sm:$0xff]
        %v408 = vld [vmem:[#allocation6 + $0x360] sm:$0xff]
        %v409 = vld [vmem:[#allocation6 + $0x368] sm:$0xff]
        %v410 = vld [vmem:[#allocation6 + $0x370] sm:$0xff]
        %v411 = vld [vmem:[#allocation6 + $0x378] sm:$0xff]
        %v412 = vld [vmem:[#allocation6 + $0x380] sm:$0xff]
        %v413 = vld [vmem:[#allocation6 + $0x388] sm:$0xff]
        %v414 = vld [vmem:[#allocation6 + $0x390] sm:$0xff]
        %v415 = vld [vmem:[#allocation6 + $0x398] sm:$0xff]
        %v416 = vld [vmem:[#allocation6 + $0x3a0] sm:$0xff]
        %v417 = vld [vmem:[#allocation6 + $0x3a8] sm:$0xff]
        %v418 = vld [vmem:[#allocation6 + $0x3b0] sm:$0xff]
        %v419 = vld [vmem:[#allocation6 + $0x3b8] sm:$0xff]
        %v420 = vld [vmem:[#allocation6 + $0x3c0] sm:$0xff]
        %v421 = vld [vmem:[#allocation6 + $0x3c8] sm:$0xff]
        %v422 = vld [vmem:[#allocation6 + $0x3d0] sm:$0xff]
        %v423 = vld [vmem:[#allocation6 + $0x3d8] sm:$0xff]
        %v424 = vld [vmem:[#allocation6 + $0x3e0] sm:$0xff]
        %v425 = vld [vmem:[#allocation6 + $0x3e8] sm:$0xff]
        %v426 = vld [vmem:[#allocation6 + $0x3f0] sm:$0xff]
        %v427 = vld [vmem:[#allocation6 + $0x3f8] sm:$0xff]
        %v428 = vld [vmem:[#allocation6 + $0x400] sm:$0xff]
        %v429 = vld [vmem:[#allocation6 + $0x408] sm:$0xff]
        %v430 = vld [vmem:[#allocation6 + $0x410] sm:$0xff]
        %v431 = vld [vmem:[#allocation6 + $0x418] sm:$0xff]
        %v432 = vld [vmem:[#allocation6 + $0x420] sm:$0xff]
        %v433 = vld [vmem:[#allocation6 + $0x428] sm:$0xff]
        %v434 = vld [vmem:[#allocation6 + $0x430] sm:$0xff]
        %v435 = vld [vmem:[#allocation6 + $0x438] sm:$0xff]
        %v436 = vld [vmem:[#allocation6 + $0x440] sm:$0xff]
        %v437 = vld [vmem:[#allocation6 + $0x448] sm:$0xff]
        %v438 = vld [vmem:[#allocation6 + $0x450] sm:$0xff]
        %v439 = vld [vmem:[#allocation6 + $0x458] sm:$0xff]
        %v440 = vld [vmem:[#allocation6 + $0x460] sm:$0xff]
        %v441 = vld [vmem:[#allocation6 + $0x468] sm:$0xff]
        %v442 = vld [vmem:[#allocation6 + $0x470] sm:$0xff]
        %v443 = vld [vmem:[#allocation6 + $0x478] sm:$0xff]
        %v444 = vld [vmem:[#allocation6 + $0x480] sm:$0xff]
        %v445 = vld [vmem:[#allocation6 + $0x488] sm:$0xff]
        %v446 = vld [vmem:[#allocation6 + $0x490] sm:$0xff]
        %v447 = vld [vmem:[#allocation6 + $0x498] sm:$0xff]
        %v448 = vld [vmem:[#allocation6 + $0x4a0] sm:$0xff]
        %v449 = vld [vmem:[#allocation6 + $0x4a8] sm:$0xff]
        %v450 = vld [vmem:[#allocation6 + $0x4b0] sm:$0xff]
        %v451 = vld [vmem:[#allocation6 + $0x4b8] sm:$0xff]
        %v452 = vld [vmem:[#allocation6 + $0x4c0] sm:$0xff]
        %v453 = vld [vmem:[#allocation6 + $0x4c8] sm:$0xff]
        %v454 = vld [vmem:[#allocation6 + $0x4d0] sm:$0xff]
        %v455 = vld [vmem:[#allocation6 + $0x4d8] sm:$0xff]
        %v456 = vld [vmem:[#allocation6 + $0x4e0] sm:$0xff]
        %v457 = vld [vmem:[#allocation6 + $0x4e8] sm:$0xff]
        %v458 = vld [vmem:[#allocation6 + $0x4f0] sm:$0xff]
        %v459 = vld [vmem:[#allocation6 + $0x4f8] sm:$0xff]
        %v460 = vld [vmem:[#allocation6 + $0x500] sm:$0xff]
        %v461 = vld [vmem:[#allocation6 + $0x508] sm:$0xff]
        %v462 = vld [vmem:[#allocation6 + $0x510] sm:$0xff]
        %v463 = vld [vmem:[#allocation6 + $0x518] sm:$0xff]
        %v464 = vld [vmem:[#allocation6 + $0x520] sm:$0xff]
        %v465 = vld [vmem:[#allocation6 + $0x528] sm:$0xff]
        %v466 = vld [vmem:[#allocation6 + $0x530] sm:$0xff]
        %v467 = vld [vmem:[#allocation6 + $0x538] sm:$0xff]
        %v468 = vld [vmem:[#allocation6 + $0x540] sm:$0xff]
        %v469 = vld [vmem:[#allocation6 + $0x548] sm:$0xff]
        %v470 = vld [vmem:[#allocation6 + $0x550] sm:$0xff]
        %v471 = vld [vmem:[#allocation6 + $0x558] sm:$0xff]
        %v472 = vld [vmem:[#allocation6 + $0x560] sm:$0xff]
        %v473 = vld [vmem:[#allocation6 + $0x568] sm:$0xff]
        %v474 = vld [vmem:[#allocation6 + $0x570] sm:$0xff]
        %v475 = vld [vmem:[#allocation6 + $0x578] sm:$0xff]
        %v476 = vld [vmem:[#allocation6 + $0x580] sm:$0xff]
        %v477 = vld [vmem:[#allocation6 + $0x588] sm:$0xff]
        %v478 = vld [vmem:[#allocation6 + $0x590] sm:$0xff]
        %v479 = vld [vmem:[#allocation6 + $0x598] sm:$0xff]
        %v480 = vld [vmem:[#allocation6 + $0x5a0] sm:$0xff]
        %v481 = vld [vmem:[#allocation6 + $0x5a8] sm:$0xff]
        %v482 = vld [vmem:[#allocation6 + $0x5b0] sm:$0xff]
        %v483 = vld [vmem:[#allocation6 + $0x5b8] sm:$0xff]
        %v484 = vld [vmem:[#allocation6 + $0x5c0] sm:$0xff]
        %v485 = vld [vmem:[#allocation6 + $0x5c8] sm:$0xff]
        %v486 = vld [vmem:[#allocation6 + $0x5d0] sm:$0xff]
        %v487 = vld [vmem:[#allocation6 + $0x5d8] sm:$0xff]
        %v488 = vld [vmem:[#allocation6 + $0x5e0] sm:$0xff]
        %v489 = vld [vmem:[#allocation6 + $0x5e8] sm:$0xff]
        %v490 = vld [vmem:[#allocation6 + $0x5f0] sm:$0xff]
        %v491 = vld [vmem:[#allocation6 + $0x5f8] sm:$0xff]
        %v492 = vld [vmem:[#allocation6 + $0x600] sm:$0xff]
        %v493 = vld [vmem:[#allocation6 + $0x608] sm:$0xff]
        %v494 = vld [vmem:[#allocation6 + $0x610] sm:$0xff]
        %v495 = vld [vmem:[#allocation6 + $0x618] sm:$0xff]
        %v496 = vld [vmem:[#allocation6 + $0x620] sm:$0xff]
        %v497 = vld [vmem:[#allocation6 + $0x628] sm:$0xff]
        %v498 = vld [vmem:[#allocation6 + $0x630] sm:$0xff]
        %v499 = vld [vmem:[#allocation6 + $0x638] sm:$0xff]
        %v500 = vld [vmem:[#allocation6 + $0x640] sm:$0xff]
        %v501 = vld [vmem:[#allocation6 + $0x648] sm:$0xff]
        %v502 = vld [vmem:[#allocation6 + $0x650] sm:$0xff]
        %v503 = vld [vmem:[#allocation6 + $0x658] sm:$0xff]
        %v504 = vld [vmem:[#allocation6 + $0x660] sm:$0xff]
        %v505 = vld [vmem:[#allocation6 + $0x668] sm:$0xff]
        %v506 = vld [vmem:[#allocation6 + $0x670] sm:$0xff]
        %v507 = vld [vmem:[#allocation6 + $0x678] sm:$0xff]
        %v508 = vld [vmem:[#allocation6 + $0x680] sm:$0xff]
        %v509 = vld [vmem:[#allocation6 + $0x688] sm:$0xff]
        %v510 = vld [vmem:[#allocation6 + $0x690] sm:$0xff]
        %v511 = vld [vmem:[#allocation6 + $0x698] sm:$0xff]
        %v512 = vld [vmem:[#allocation6 + $0x6a0] sm:$0xff]
        %v513 = vld [vmem:[#allocation6 + $0x6a8] sm:$0xff]
        %v514 = vld [vmem:[#allocation6 + $0x6b0] sm:$0xff]
        %v515 = vld [vmem:[#allocation6 + $0x6b8] sm:$0xff]
        %v516 = vld [vmem:[#allocation6 + $0x6c0] sm:$0xff]
        %v517 = vld [vmem:[#allocation6 + $0x6c8] sm:$0xff]
        %v518 = vld [vmem:[#allocation6 + $0x6d0] sm:$0xff]
        %v519 = vld [vmem:[#allocation6 + $0x6d8] sm:$0xff]
        %v520 = vld [vmem:[#allocation6 + $0x6e0] sm:$0xff]
        %v521 = vld [vmem:[#allocation6 + $0x6e8] sm:$0xff]
        %v522 = vld [vmem:[#allocation6 + $0x6f0] sm:$0xff]
        %v523 = vld [vmem:[#allocation6 + $0x6f8] sm:$0xff]
        %v524 = vld [vmem:[#allocation6 + $0x700] sm:$0xff]
        %v525 = vld [vmem:[#allocation6 + $0x708] sm:$0xff]
        %v526 = vld [vmem:[#allocation6 + $0x710] sm:$0xff]
        %v527 = vld [vmem:[#allocation6 + $0x718] sm:$0xff]
        %v528 = vld [vmem:[#allocation6 + $0x720] sm:$0xff]
        %v529 = vld [vmem:[#allocation6 + $0x728] sm:$0xff]
        %v530 = vld [vmem:[#allocation6 + $0x730] sm:$0xff]
        %v531 = vld [vmem:[#allocation6 + $0x738] sm:$0xff]
        %v532 = vld [vmem:[#allocation6 + $0x740] sm:$0xff]
        %v533 = vld [vmem:[#allocation6 + $0x748] sm:$0xff]
        %v534 = vld [vmem:[#allocation6 + $0x750] sm:$0xff]
        %v535 = vld [vmem:[#allocation6 + $0x758] sm:$0xff]
        %v536 = vld [vmem:[#allocation6 + $0x760] sm:$0xff]
        %v537 = vld [vmem:[#allocation6 + $0x768] sm:$0xff]
        %v538 = vld [vmem:[#allocation6 + $0x770] sm:$0xff]
        %v539 = vld [vmem:[#allocation6 + $0x778] sm:$0xff]
        %v540 = vld [vmem:[#allocation6 + $0x780] sm:$0xff]
        %v541 = vld [vmem:[#allocation6 + $0x788] sm:$0xff]
        %v542 = vld [vmem:[#allocation6 + $0x790] sm:$0xff]
        %v543 = vld [vmem:[#allocation6 + $0x798] sm:$0xff]
        %v544 = vld [vmem:[#allocation6 + $0x7a0] sm:$0xff]
        %v545 = vld [vmem:[#allocation6 + $0x7a8] sm:$0xff]
        %v546 = vld [vmem:[#allocation6 + $0x7b0] sm:$0xff]
        %v547 = vld [vmem:[#allocation6 + $0x7b8] sm:$0xff]
        %v548 = vld [vmem:[#allocation6 + $0x7c0] sm:$0xff]
        %v549 = vld [vmem:[#allocation6 + $0x7c8] sm:$0xff]
        %v550 = vld [vmem:[#allocation6 + $0x7d0] sm:$0xff]
        %v551 = vld [vmem:[#allocation6 + $0x7d8] sm:$0xff]
        %v552 = vld [vmem:[#allocation6 + $0x7e0] sm:$0xff]
        %v553 = vld [vmem:[#allocation6 + $0x7e8] sm:$0xff]
        %v554 = vld [vmem:[#allocation6 + $0x7f0] sm:$0xff]
        %v555 = vld [vmem:[#allocation6 + $0x7f8] sm:$0xff]
        %v556 = vld [vmem:[%s2] sm:$0xf]
        %v558 = vlaneseq
        %v559 = vshrl.u32 %v558, 7
        %v560 = vsub.s32 0, %v559
        %v561 = vrot.slane %v556, %v560
        %v562 = vlaneseq
        %v563 = vshrl.u32 %v562, 7
        %v564 = vsub.s32 1, %v563
        %v565 = vrot.slane %v556, %v564
        %v566 = vlaneseq
        %v567 = vshrl.u32 %v566, 7
        %v568 = vsub.s32 2, %v567
        %v569 = vrot.slane %v556, %v568
        %v570 = vlaneseq
        %v571 = vshrl.u32 %v570, 7
        %v572 = vsub.s32 3, %v571
        %v573 = vrot.slane %v556, %v572
        %578 = vmatprep.subr.mxu0 %v301
        %579 = vmatpush1.msra.mxu0 %v300
        %580 = vmatprep.subr.mxu0 %v305
        %581 = vmatpush1.msra.mxu0 %v304
        %582 = vmatprep.subr.mxu0 %v309
        %583 = vmatpush1.msra.mxu0 %v308
        %584 = vmatprep.subr.mxu0 %v313
        %585 = vmatpush1.msra.mxu0 %v312
        %586 = vmatprep.subr.mxu0 %v317
        %587 = vmatpush1.msra.mxu0 %v316
        %588 = vmatprep.subr.mxu0 %v321
        %589 = vmatpush1.msra.mxu0 %v320
        %590 = vmatprep.subr.mxu0 %v325
        %591 = vmatpush1.msra.mxu0 %v324
        %592 = vmatprep.subr.mxu0 %v329
        %593 = vmatpush1.msra.mxu0 %v328
        %594 = vmatprep.subr.mxu0 %v333
        %595 = vmatpush1.msra.mxu0 %v332
        %596 = vmatprep.subr.mxu0 %v337
        %597 = vmatpush1.msra.mxu0 %v336
        %598 = vmatprep.subr.mxu0 %v341
        %599 = vmatpush1.msra.mxu0 %v340
        %600 = vmatprep.subr.mxu0 %v345
        %601 = vmatpush1.msra.mxu0 %v344
        %602 = vmatprep.subr.mxu0 %v349
        %603 = vmatpush1.msra.mxu0 %v348
        %604 = vmatprep.subr.mxu0 %v353
        %605 = vmatpush1.msra.mxu0 %v352
        %606 = vmatprep.subr.mxu0 %v357
        %607 = vmatpush1.msra.mxu0 %v356
        %608 = vmatprep.subr.mxu0 %v361
        %609 = vmatpush1.msra.mxu0 %v360
        %610 = vmatprep.subr.mxu0 %v365
        %611 = vmatpush1.msra.mxu0 %v364
        %612 = vmatprep.subr.mxu0 %v369
        %613 = vmatpush1.msra.mxu0 %v368
        %614 = vmatprep.subr.mxu0 %v373
        %615 = vmatpush1.msra.mxu0 %v372
        %616 = vmatprep.subr.mxu0 %v377
        %617 = vmatpush1.msra.mxu0 %v376
        %618 = vmatprep.subr.mxu0 %v381
        %619 = vmatpush1.msra.mxu0 %v380
        %620 = vmatprep.subr.mxu0 %v385
        %621 = vmatpush1.msra.mxu0 %v384
        %622 = vmatprep.subr.mxu0 %v389
        %623 = vmatpush1.msra.mxu0 %v388
        %624 = vmatprep.subr.mxu0 %v393
        %625 = vmatpush1.msra.mxu0 %v392
        %626 = vmatprep.subr.mxu0 %v397
        %627 = vmatpush1.msra.mxu0 %v396
        %628 = vmatprep.subr.mxu0 %v401
        %629 = vmatpush1.msra.mxu0 %v400
        %630 = vmatprep.subr.mxu0 %v405
        %631 = vmatpush1.msra.mxu0 %v404
        %632 = vmatprep.subr.mxu0 %v409
        %633 = vmatpush1.msra.mxu0 %v408
        %634 = vmatprep.subr.mxu0 %v413
        %635 = vmatpush1.msra.mxu0 %v412
        %636 = vmatprep.subr.mxu0 %v417
        %637 = vmatpush1.msra.mxu0 %v416
        %638 = vmatprep.subr.mxu0 %v421
        %639 = vmatpush1.msra.mxu0 %v420
        %640 = vmatprep.subr.mxu0 %v425
        %641 = vmatpush1.msra.mxu0 %v424
        %642 = vmatprep.mubr.f32.mxu0 %v293
        %643 = vmatmul.mubr.f32.gmra.mrb[0].mxu0 %v292
        %v644 = vpop.f32.mrb[0].mxu0
        %v645 = vadd.f32 %v561, %v644
        %v646 = vpop.f32.mrb[0].mxu0
        %v647 = vadd.f32 %v565, %v646
        %648 = vmatprep.mubr.f32.mxu0 %v297
        %649 = vmatmul.mubr.f32.gmra.mrb[0].mxu0 %v296
        %v650 = vpop.f32.mrb[0].mxu0
        %v651 = vadd.f32 %v561, %v650
        %v652 = vpop.f32.mrb[0].mxu0
        %v653 = vadd.f32 %v565, %v652
        %654 = vdwg.mxu0
        %655 = vmatprep.subr.mxu0 %v429
        %656 = vmatpush1.msra.mxu0 %v428
        %657 = vmatprep.subr.mxu0 %v433
        %658 = vmatpush1.msra.mxu0 %v432
        %659 = vmatprep.subr.mxu0 %v437
        %660 = vmatpush1.msra.mxu0 %v436
        %661 = vmatprep.subr.mxu0 %v441
        %662 = vmatpush1.msra.mxu0 %v440
        %663 = vmatprep.subr.mxu0 %v445
        %664 = vmatpush1.msra.mxu0 %v444
        %665 = vmatprep.subr.mxu0 %v449
        %666 = vmatpush1.msra.mxu0 %v448
        %667 = vmatprep.subr.mxu0 %v453
        %668 = vmatpush1.msra.mxu0 %v452
        %669 = vmatprep.subr.mxu0 %v457
        %670 = vmatpush1.msra.mxu0 %v456
        %671 = vmatprep.subr.mxu0 %v461
        %672 = vmatpush1.msra.mxu0 %v460
        %673 = vmatprep.subr.mxu0 %v465
        %674 = vmatpush1.msra.mxu0 %v464
        %675 = vmatprep.subr.mxu0 %v469
        %676 = vmatpush1.msra.mxu0 %v468
        %677 = vmatprep.subr.mxu0 %v473
        %678 = vmatpush1.msra.mxu0 %v472
        %679 = vmatprep.subr.mxu0 %v477
        %680 = vmatpush1.msra.mxu0 %v476
        %681 = vmatprep.subr.mxu0 %v481
        %682 = vmatpush1.msra.mxu0 %v480
        %683 = vmatprep.subr.mxu0 %v485
        %684 = vmatpush1.msra.mxu0 %v484
        %685 = vmatprep.subr.mxu0 %v489
        %686 = vmatpush1.msra.mxu0 %v488
        %687 = vmatprep.subr.mxu0 %v493
        %688 = vmatpush1.msra.mxu0 %v492
        %689 = vmatprep.subr.mxu0 %v497
        %690 = vmatpush1.msra.mxu0 %v496
        %691 = vmatprep.subr.mxu0 %v501
        %692 = vmatpush1.msra.mxu0 %v500
        %693 = vmatprep.subr.mxu0 %v505
        %694 = vmatpush1.msra.mxu0 %v504
        %695 = vmatprep.subr.mxu0 %v509
        %696 = vmatpush1.msra.mxu0 %v508
        %697 = vmatprep.subr.mxu0 %v513
        %698 = vmatpush1.msra.mxu0 %v512
        %699 = vmatprep.subr.mxu0 %v517
        %700 = vmatpush1.msra.mxu0 %v516
        %701 = vmatprep.subr.mxu0 %v521
        %702 = vmatpush1.msra.mxu0 %v520
        %703 = vmatprep.subr.mxu0 %v525
        %704 = vmatpush1.msra.mxu0 %v524
        %705 = vmatprep.subr.mxu0 %v529
        %706 = vmatpush1.msra.mxu0 %v528
        %707 = vmatprep.subr.mxu0 %v533
        %708 = vmatpush1.msra.mxu0 %v532
        %709 = vmatprep.subr.mxu0 %v537
        %710 = vmatpush1.msra.mxu0 %v536
        %711 = vmatprep.subr.mxu0 %v541
        %712 = vmatpush1.msra.mxu0 %v540
        %713 = vmatprep.subr.mxu0 %v545
        %714 = vmatpush1.msra.mxu0 %v544
        %715 = vmatprep.subr.mxu0 %v549
        %716 = vmatpush1.msra.mxu0 %v548
        %717 = vmatprep.subr.mxu0 %v553
        %718 = vmatpush1.msra.mxu0 %v552
        %719 = vmatprep.mubr.f32.mxu0 %v295
        %720 = vmatmul.mubr.f32.gmra.mrb[0].mxu0 %v294
        %v721 = vpop.f32.mrb[0].mxu0
        %v722 = vadd.f32 %v645, %v721
        %v723 = vpop.f32.mrb[0].mxu0
        %v724 = vadd.f32 %v647, %v723
        %725 = vmatprep.mubr.f32.mxu0 %v299
        %726 = vmatmul.mubr.f32.gmra.mrb[0].mxu0 %v298
        %v727 = vpop.f32.mrb[0].mxu0
        %v728 = vadd.f32 %v651, %v727
        %v729 = vpop.f32.mrb[0].mxu0
        %v730 = vadd.f32 %v653, %v729
        %731 = vdwg.mxu0
        %732 = vmatprep.subr.mxu0 %v303
        %733 = vmatpush1.msra.mxu0 %v302
        %734 = vmatprep.subr.mxu0 %v307
        %735 = vmatpush1.msra.mxu0 %v306
        %736 = vmatprep.subr.mxu0 %v311
        %737 = vmatpush1.msra.mxu0 %v310
        %738 = vmatprep.subr.mxu0 %v315
        %739 = vmatpush1.msra.mxu0 %v314
        %740 = vmatprep.subr.mxu0 %v319
        %741 = vmatpush1.msra.mxu0 %v318
        %742 = vmatprep.subr.mxu0 %v323
        %743 = vmatpush1.msra.mxu0 %v322
        %744 = vmatprep.subr.mxu0 %v327
        %745 = vmatpush1.msra.mxu0 %v326
        %746 = vmatprep.subr.mxu0 %v331
        %747 = vmatpush1.msra.mxu0 %v330
        %748 = vmatprep.subr.mxu0 %v335
        %749 = vmatpush1.msra.mxu0 %v334
        %750 = vmatprep.subr.mxu0 %v339
        %751 = vmatpush1.msra.mxu0 %v338
        %752 = vmatprep.subr.mxu0 %v343
        %753 = vmatpush1.msra.mxu0 %v342
        %754 = vmatprep.subr.mxu0 %v347
        %755 = vmatpush1.msra.mxu0 %v346
        %756 = vmatprep.subr.mxu0 %v351
        %757 = vmatpush1.msra.mxu0 %v350
        %758 = vmatprep.subr.mxu0 %v355
        %759 = vmatpush1.msra.mxu0 %v354
        %760 = vmatprep.subr.mxu0 %v359
        %761 = vmatpush1.msra.mxu0 %v358
        %762 = vmatprep.subr.mxu0 %v363
        %763 = vmatpush1.msra.mxu0 %v362
        %764 = vmatprep.subr.mxu0 %v367
        %765 = vmatpush1.msra.mxu0 %v366
        %766 = vmatprep.subr.mxu0 %v371
        %767 = vmatpush1.msra.mxu0 %v370
        %768 = vmatprep.subr.mxu0 %v375
        %769 = vmatpush1.msra.mxu0 %v374
        %770 = vmatprep.subr.mxu0 %v379
        %771 = vmatpush1.msra.mxu0 %v378
        %772 = vmatprep.subr.mxu0 %v383
        %773 = vmatpush1.msra.mxu0 %v382
        %774 = vmatprep.subr.mxu0 %v387
        %775 = vmatpush1.msra.mxu0 %v386
        %776 = vmatprep.subr.mxu0 %v391
        %777 = vmatpush1.msra.mxu0 %v390
        %778 = vmatprep.subr.mxu0 %v395
        %779 = vmatpush1.msra.mxu0 %v394
        %780 = vmatprep.subr.mxu0 %v399
        %781 = vmatpush1.msra.mxu0 %v398
        %782 = vmatprep.subr.mxu0 %v403
        %783 = vmatpush1.msra.mxu0 %v402
        %784 = vmatprep.subr.mxu0 %v407
        %785 = vmatpush1.msra.mxu0 %v406
        %786 = vmatprep.subr.mxu0 %v411
        %787 = vmatpush1.msra.mxu0 %v410
        %788 = vmatprep.subr.mxu0 %v415
        %789 = vmatpush1.msra.mxu0 %v414
        %790 = vmatprep.subr.mxu0 %v419
        %791 = vmatpush1.msra.mxu0 %v418
        %792 = vmatprep.subr.mxu0 %v423
        %793 = vmatpush1.msra.mxu0 %v422
        %794 = vmatprep.subr.mxu0 %v427
        %795 = vmatpush1.msra.mxu0 %v426
        %796 = vmatprep.mubr.f32.mxu0 %v293
        %797 = vmatmul.mubr.f32.gmra.mrb[0].mxu0 %v292
        %v798 = vpop.f32.mrb[0].mxu0
        %v799 = vadd.f32 %v569, %v798
        %v800 = vpop.f32.mrb[0].mxu0
        %v801 = vadd.f32 %v573, %v800
        %802 = vmatprep.mubr.f32.mxu0 %v297
        %803 = vmatmul.mubr.f32.gmra.mrb[0].mxu0 %v296
        %v804 = vpop.f32.mrb[0].mxu0
        %v805 = vadd.f32 %v569, %v804
        %v806 = vpop.f32.mrb[0].mxu0
        %v807 = vadd.f32 %v573, %v806
        %808 = vdwg.mxu0
        %809 = vmatprep.subr.mxu0 %v431
        %810 = vmatpush1.msra.mxu0 %v430
        %811 = vmatprep.subr.mxu0 %v435
        %812 = vmatpush1.msra.mxu0 %v434
        %813 = vmatprep.subr.mxu0 %v439
        %814 = vmatpush1.msra.mxu0 %v438
        %815 = vmatprep.subr.mxu0 %v443
        %816 = vmatpush1.msra.mxu0 %v442
        %817 = vmatprep.subr.mxu0 %v447
        %818 = vmatpush1.msra.mxu0 %v446
        %819 = vmatprep.subr.mxu0 %v451
        %820 = vmatpush1.msra.mxu0 %v450
        %821 = vmatprep.subr.mxu0 %v455
        %822 = vmatpush1.msra.mxu0 %v454
        %823 = vmatprep.subr.mxu0 %v459
        %824 = vmatpush1.msra.mxu0 %v458
        %825 = vmatprep.subr.mxu0 %v463
        %826 = vmatpush1.msra.mxu0 %v462
        %827 = vmatprep.subr.mxu0 %v467
        %828 = vmatpush1.msra.mxu0 %v466
        %829 = vmatprep.subr.mxu0 %v471
        %830 = vmatpush1.msra.mxu0 %v470
        %831 = vmatprep.subr.mxu0 %v475
        %832 = vmatpush1.msra.mxu0 %v474
        %833 = vmatprep.subr.mxu0 %v479
        %834 = vmatpush1.msra.mxu0 %v478
        %835 = vmatprep.subr.mxu0 %v483
        %836 = vmatpush1.msra.mxu0 %v482
        %837 = vmatprep.subr.mxu0 %v487
        %838 = vmatpush1.msra.mxu0 %v486
        %839 = vmatprep.subr.mxu0 %v491
        %840 = vmatpush1.msra.mxu0 %v490
        %841 = vmatprep.subr.mxu0 %v495
        %842 = vmatpush1.msra.mxu0 %v494
        %843 = vmatprep.subr.mxu0 %v499
        %844 = vmatpush1.msra.mxu0 %v498
        %845 = vmatprep.subr.mxu0 %v503
        %846 = vmatpush1.msra.mxu0 %v502
        %847 = vmatprep.subr.mxu0 %v507
        %848 = vmatpush1.msra.mxu0 %v506
        %849 = vmatprep.subr.mxu0 %v511
        %850 = vmatpush1.msra.mxu0 %v510
        %851 = vmatprep.subr.mxu0 %v515
        %852 = vmatpush1.msra.mxu0 %v514
        %853 = vmatprep.subr.mxu0 %v519
        %854 = vmatpush1.msra.mxu0 %v518
        %855 = vmatprep.subr.mxu0 %v523
        %856 = vmatpush1.msra.mxu0 %v522
        %857 = vmatprep.subr.mxu0 %v527
        %858 = vmatpush1.msra.mxu0 %v526
        %859 = vmatprep.subr.mxu0 %v531
        %860 = vmatpush1.msra.mxu0 %v530
        %861 = vmatprep.subr.mxu0 %v535
        %862 = vmatpush1.msra.mxu0 %v534
        %863 = vmatprep.subr.mxu0 %v539
        %864 = vmatpush1.msra.mxu0 %v538
        %865 = vmatprep.subr.mxu0 %v543
        %866 = vmatpush1.msra.mxu0 %v542
        %867 = vmatprep.subr.mxu0 %v547
        %868 = vmatpush1.msra.mxu0 %v546
        %869 = vmatprep.subr.mxu0 %v551
        %870 = vmatpush1.msra.mxu0 %v550
        %871 = vmatprep.subr.mxu0 %v555
        %872 = vmatpush1.msra.mxu0 %v554
        %873 = vmatprep.mubr.f32.mxu0 %v295
        %874 = vmatmul.mubr.f32.gmra.mrb[0].mxu0 %v294
        %v875 = vpop.f32.mrb[0].mxu0
        %v876 = vadd.f32 %v799, %v875
        %v877 = vpop.f32.mrb[0].mxu0
        %v878 = vadd.f32 %v801, %v877
        %879 = vmatprep.mubr.f32.mxu0 %v299
        %880 = vmatmul.mubr.f32.gmra.mrb[0].mxu0 %v298
        %v881 = vpop.f32.mrb[0].mxu0
        %v882 = vadd.f32 %v805, %v881
        %v883 = vpop.f32.mrb[0].mxu0
        %v884 = vadd.f32 %v807, %v883
        %885 = vdwg.mxu0
        %v886 = vmax.f32 %v722, 0.0
        %v887 = vmax.f32 %v724, 0.0
        %v888 = vmax.f32 %v876, 0.0
        %v889 = vmax.f32 %v878, 0.0
        %v890 = vmax.f32 %v728, 0.0
        %v891 = vmax.f32 %v730, 0.0
        %v892 = vmax.f32 %v882, 0.0
        %v893 = vmax.f32 %v884, 0.0
        %894 = vst [vmem:[#allocation2] sm:$0xff] %v886
        %895 = vst [vmem:[#allocation2 + $0x8] sm:$0xff] %v887
        %896 = vst [vmem:[#allocation2 + $0x10] sm:$0xff] %v888
        %897 = vst [vmem:[#allocation2 + $0x18] sm:$0xff] %v889
        %898 = vst [vmem:[#allocation2 + $0x20] sm:$0xff] %v890
        %899 = vst [vmem:[#allocation2 + $0x28] sm:$0xff] %v891
        %900 = vst [vmem:[#allocation2 + $0x30] sm:$0xff] %v892
        %901 = vst [vmem:[#allocation2 + $0x38] sm:$0xff] %v893
        %v902 = vld [vmem:[#allocation2] sm:$0xff]
        %v903 = vld [vmem:[#allocation2 + $0x8] sm:$0xff]
        %v904 = vld [vmem:[#allocation2 + $0x10] sm:$0xff]
        %v905 = vld [vmem:[#allocation2 + $0x18] sm:$0xff]
        %v906 = vld [vmem:[#allocation2 + $0x20] sm:$0xff]
        %v907 = vld [vmem:[#allocation2 + $0x28] sm:$0xff]
        %v908 = vld [vmem:[#allocation2 + $0x30] sm:$0xff]
        %v909 = vld [vmem:[#allocation2 + $0x38] sm:$0xff]
        %v910 = vld [vmem:[#allocation8] sm:$0xff]
        %v911 = vld [vmem:[#allocation8 + $0x8] sm:$0xff]
        %v912 = vld [vmem:[#allocation8 + $0x10] sm:$0xff]
        %v913 = vld [vmem:[#allocation8 + $0x18] sm:$0xff]
        %v914 = vld [vmem:[#allocation8 + $0x20] sm:$0xff]
        %v915 = vld [vmem:[#allocation8 + $0x28] sm:$0xff]
        %v916 = vld [vmem:[#allocation8 + $0x30] sm:$0xff]
        %v917 = vld [vmem:[#allocation8 + $0x38] sm:$0xff]
        %v918 = vld [vmem:[#allocation8 + $0x40] sm:$0xff]
        %v919 = vld [vmem:[#allocation8 + $0x48] sm:$0xff]
        %v920 = vld [vmem:[#allocation8 + $0x50] sm:$0xff]
        %v921 = vld [vmem:[#allocation8 + $0x58] sm:$0xff]
        %v922 = vld [vmem:[#allocation8 + $0x60] sm:$0xff]
        %v923 = vld [vmem:[#allocation8 + $0x68] sm:$0xff]
        %v924 = vld [vmem:[#allocation8 + $0x70] sm:$0xff]
        %v925 = vld [vmem:[#allocation8 + $0x78] sm:$0xff]
        %v926 = vld [vmem:[#allocation8 + $0x80] sm:$0xff]
        %v927 = vld [vmem:[#allocation8 + $0x88] sm:$0xff]
        %v928 = vld [vmem:[#allocation8 + $0x90] sm:$0xff]
        %v929 = vld [vmem:[#allocation8 + $0x98] sm:$0xff]
        %v930 = vld [vmem:[#allocation8 + $0xa0] sm:$0xff]
        %v931 = vld [vmem:[#allocation8 + $0xa8] sm:$0xff]
        %v932 = vld [vmem:[#allocation8 + $0xb0] sm:$0xff]
        %v933 = vld [vmem:[#allocation8 + $0xb8] sm:$0xff]
        %v934 = vld [vmem:[#allocation8 + $0xc0] sm:$0xff]
        %v935 = vld [vmem:[#allocation8 + $0xc8] sm:$0xff]
        %v936 = vld [vmem:[#allocation8 + $0xd0] sm:$0xff]
        %v937 = vld [vmem:[#allocation8 + $0xd8] sm:$0xff]
        %v938 = vld [vmem:[#allocation8 + $0xe0] sm:$0xff]
        %v939 = vld [vmem:[#allocation8 + $0xe8] sm:$0xff]
        %v940 = vld [vmem:[#allocation8 + $0xf0] sm:$0xff]
        %v941 = vld [vmem:[#allocation8 + $0xf8] sm:$0xff]
        %v942 = vld [vmem:[#allocation8 + $0x100] sm:$0xff]
        %v943 = vld [vmem:[#allocation8 + $0x108] sm:$0xff]
        %v944 = vld [vmem:[#allocation8 + $0x110] sm:$0xff]
        %v945 = vld [vmem:[#allocation8 + $0x118] sm:$0xff]
        %v946 = vld [vmem:[#allocation8 + $0x120] sm:$0xff]
        %v947 = vld [vmem:[#allocation8 + $0x128] sm:$0xff]
        %v948 = vld [vmem:[#allocation8 + $0x130] sm:$0xff]
        %v949 = vld [vmem:[#allocation8 + $0x138] sm:$0xff]
        %v950 = vld [vmem:[#allocation8 + $0x140] sm:$0xff]
        %v951 = vld [vmem:[#allocation8 + $0x148] sm:$0xff]
        %v952 = vld [vmem:[#allocation8 + $0x150] sm:$0xff]
        %v953 = vld [vmem:[#allocation8 + $0x158] sm:$0xff]
        %v954 = vld [vmem:[#allocation8 + $0x160] sm:$0xff]
        %v955 = vld [vmem:[#allocation8 + $0x168] sm:$0xff]
        %v956 = vld [vmem:[#allocation8 + $0x170] sm:$0xff]
        %v957 = vld [vmem:[#allocation8 + $0x178] sm:$0xff]
        %v958 = vld [vmem:[#allocation8 + $0x180] sm:$0xff]
        %v959 = vld [vmem:[#allocation8 + $0x188] sm:$0xff]
        %v960 = vld [vmem:[#allocation8 + $0x190] sm:$0xff]
        %v961 = vld [vmem:[#allocation8 + $0x198] sm:$0xff]
        %v962 = vld [vmem:[#allocation8 + $0x1a0] sm:$0xff]
        %v963 = vld [vmem:[#allocation8 + $0x1a8] sm:$0xff]
        %v964 = vld [vmem:[#allocation8 + $0x1b0] sm:$0xff]
        %v965 = vld [vmem:[#allocation8 + $0x1b8] sm:$0xff]
        %v966 = vld [vmem:[#allocation8 + $0x1c0] sm:$0xff]
        %v967 = vld [vmem:[#allocation8 + $0x1c8] sm:$0xff]
        %v968 = vld [vmem:[#allocation8 + $0x1d0] sm:$0xff]
        %v969 = vld [vmem:[#allocation8 + $0x1d8] sm:$0xff]
        %v970 = vld [vmem:[#allocation8 + $0x1e0] sm:$0xff]
        %v971 = vld [vmem:[#allocation8 + $0x1e8] sm:$0xff]
        %v972 = vld [vmem:[#allocation8 + $0x1f0] sm:$0xff]
        %v973 = vld [vmem:[#allocation8 + $0x1f8] sm:$0xff]
        %v974 = vld [vmem:[#allocation8 + $0x200] sm:$0xff]
        %v975 = vld [vmem:[#allocation8 + $0x208] sm:$0xff]
        %v976 = vld [vmem:[#allocation8 + $0x210] sm:$0xff]
        %v977 = vld [vmem:[#allocation8 + $0x218] sm:$0xff]
        %v978 = vld [vmem:[#allocation8 + $0x220] sm:$0xff]
        %v979 = vld [vmem:[#allocation8 + $0x228] sm:$0xff]
        %v980 = vld [vmem:[#allocation8 + $0x230] sm:$0xff]
        %v981 = vld [vmem:[#allocation8 + $0x238] sm:$0xff]
        %v982 = vld [vmem:[#allocation8 + $0x240] sm:$0xff]
        %v983 = vld [vmem:[#allocation8 + $0x248] sm:$0xff]
        %v984 = vld [vmem:[#allocation8 + $0x250] sm:$0xff]
        %v985 = vld [vmem:[#allocation8 + $0x258] sm:$0xff]
        %v986 = vld [vmem:[#allocation8 + $0x260] sm:$0xff]
        %v987 = vld [vmem:[#allocation8 + $0x268] sm:$0xff]
        %v988 = vld [vmem:[#allocation8 + $0x270] sm:$0xff]
        %v989 = vld [vmem:[#allocation8 + $0x278] sm:$0xff]
        %v990 = vld [vmem:[#allocation8 + $0x280] sm:$0xff]
        %v991 = vld [vmem:[#allocation8 + $0x288] sm:$0xff]
        %v992 = vld [vmem:[#allocation8 + $0x290] sm:$0xff]
        %v993 = vld [vmem:[#allocation8 + $0x298] sm:$0xff]
        %v994 = vld [vmem:[#allocation8 + $0x2a0] sm:$0xff]
        %v995 = vld [vmem:[#allocation8 + $0x2a8] sm:$0xff]
        %v996 = vld [vmem:[#allocation8 + $0x2b0] sm:$0xff]
        %v997 = vld [vmem:[#allocation8 + $0x2b8] sm:$0xff]
        %v998 = vld [vmem:[#allocation8 + $0x2c0] sm:$0xff]
        %v999 = vld [vmem:[#allocation8 + $0x2c8] sm:$0xff]
        %v1000 = vld [vmem:[#allocation8 + $0x2d0] sm:$0xff]
        %v1001 = vld [vmem:[#allocation8 + $0x2d8] sm:$0xff]
        %v1002 = vld [vmem:[#allocation8 + $0x2e0] sm:$0xff]
        %v1003 = vld [vmem:[#allocation8 + $0x2e8] sm:$0xff]
        %v1004 = vld [vmem:[#allocation8 + $0x2f0] sm:$0xff]
        %v1005 = vld [vmem:[#allocation8 + $0x2f8] sm:$0xff]
        %v1006 = vld [vmem:[#allocation8 + $0x300] sm:$0xff]
        %v1007 = vld [vmem:[#allocation8 + $0x308] sm:$0xff]
        %v1008 = vld [vmem:[#allocation8 + $0x310] sm:$0xff]
        %v1009 = vld [vmem:[#allocation8 + $0x318] sm:$0xff]
        %v1010 = vld [vmem:[#allocation8 + $0x320] sm:$0xff]
        %v1011 = vld [vmem:[#allocation8 + $0x328] sm:$0xff]
        %v1012 = vld [vmem:[#allocation8 + $0x330] sm:$0xff]
        %v1013 = vld [vmem:[#allocation8 + $0x338] sm:$0xff]
        %v1014 = vld [vmem:[#allocation8 + $0x340] sm:$0xff]
        %v1015 = vld [vmem:[#allocation8 + $0x348] sm:$0xff]
        %v1016 = vld [vmem:[#allocation8 + $0x350] sm:$0xff]
        %v1017 = vld [vmem:[#allocation8 + $0x358] sm:$0xff]
        %v1018 = vld [vmem:[#allocation8 + $0x360] sm:$0xff]
        %v1019 = vld [vmem:[#allocation8 + $0x368] sm:$0xff]
        %v1020 = vld [vmem:[#allocation8 + $0x370] sm:$0xff]
        %v1021 = vld [vmem:[#allocation8 + $0x378] sm:$0xff]
        %v1022 = vld [vmem:[#allocation8 + $0x380] sm:$0xff]
        %v1023 = vld [vmem:[#allocation8 + $0x388] sm:$0xff]
        %v1024 = vld [vmem:[#allocation8 + $0x390] sm:$0xff]
        %v1025 = vld [vmem:[#allocation8 + $0x398] sm:$0xff]
        %v1026 = vld [vmem:[#allocation8 + $0x3a0] sm:$0xff]
        %v1027 = vld [vmem:[#allocation8 + $0x3a8] sm:$0xff]
        %v1028 = vld [vmem:[#allocation8 + $0x3b0] sm:$0xff]
        %v1029 = vld [vmem:[#allocation8 + $0x3b8] sm:$0xff]
        %v1030 = vld [vmem:[#allocation8 + $0x3c0] sm:$0xff]
        %v1031 = vld [vmem:[#allocation8 + $0x3c8] sm:$0xff]
        %v1032 = vld [vmem:[#allocation8 + $0x3d0] sm:$0xff]
        %v1033 = vld [vmem:[#allocation8 + $0x3d8] sm:$0xff]
        %v1034 = vld [vmem:[#allocation8 + $0x3e0] sm:$0xff]
        %v1035 = vld [vmem:[#allocation8 + $0x3e8] sm:$0xff]
        %v1036 = vld [vmem:[#allocation8 + $0x3f0] sm:$0xff]
        %v1037 = vld [vmem:[#allocation8 + $0x3f8] sm:$0xff]
        %v1038 = vld [vmem:[%s4] sm:$0x3]
        %v1040 = vlaneseq
        %v1041 = vshrl.u32 %v1040, 7
        %v1042 = vsub.s32 0, %v1041
        %v1043 = vrot.slane %v1038, %v1042
        %v1044 = vlaneseq
        %v1045 = vshrl.u32 %v1044, 7
        %v1046 = vsub.s32 1, %v1045
        %v1047 = vrot.slane %v1038, %v1046
        %1050 = vmatprep.subr.mxu0 %v911
        %1051 = vmatpush1.msra.mxu0 %v910
        %1052 = vmatprep.subr.mxu0 %v913
        %1053 = vmatpush1.msra.mxu0 %v912
        %1054 = vmatprep.subr.mxu0 %v915
        %1055 = vmatpush1.msra.mxu0 %v914
        %1056 = vmatprep.subr.mxu0 %v917
        %1057 = vmatpush1.msra.mxu0 %v916
        %1058 = vmatprep.subr.mxu0 %v919
        %1059 = vmatpush1.msra.mxu0 %v918
        %1060 = vmatprep.subr.mxu0 %v921
        %1061 = vmatpush1.msra.mxu0 %v920
        %1062 = vmatprep.subr.mxu0 %v923
        %1063 = vmatpush1.msra.mxu0 %v922
        %1064 = vmatprep.subr.mxu0 %v925
        %1065 = vmatpush1.msra.mxu0 %v924
        %1066 = vmatprep.subr.mxu0 %v927
        %1067 = vmatpush1.msra.mxu0 %v926
        %1068 = vmatprep.subr.mxu0 %v929
        %1069 = vmatpush1.msra.mxu0 %v928
        %1070 = vmatprep.subr.mxu0 %v931
        %1071 = vmatpush1.msra.mxu0 %v930
        %1072 = vmatprep.subr.mxu0 %v933
        %1073 = vmatpush1.msra.mxu0 %v932
        %1074 = vmatprep.subr.mxu0 %v935
        %1075 = vmatpush1.msra.mxu0 %v934
        %1076 = vmatprep.subr.mxu0 %v937
        %1077 = vmatpush1.msra.mxu0 %v936
        %1078 = vmatprep.subr.mxu0 %v939
        %1079 = vmatpush1.msra.mxu0 %v938
        %1080 = vmatprep.subr.mxu0 %v941
        %1081 = vmatpush1.msra.mxu0 %v940
        %1082 = vmatprep.subr.mxu0 %v943
        %1083 = vmatpush1.msra.mxu0 %v942
        %1084 = vmatprep.subr.mxu0 %v945
        %1085 = vmatpush1.msra.mxu0 %v944
        %1086 = vmatprep.subr.mxu0 %v947
        %1087 = vmatpush1.msra.mxu0 %v946
        %1088 = vmatprep.subr.mxu0 %v949
        %1089 = vmatpush1.msra.mxu0 %v948
        %1090 = vmatprep.subr.mxu0 %v951
        %1091 = vmatpush1.msra.mxu0 %v950
        %1092 = vmatprep.subr.mxu0 %v953
        %1093 = vmatpush1.msra.mxu0 %v952
        %1094 = vmatprep.subr.mxu0 %v955
        %1095 = vmatpush1.msra.mxu0 %v954
        %1096 = vmatprep.subr.mxu0 %v957
        %1097 = vmatpush1.msra.mxu0 %v956
        %1098 = vmatprep.subr.mxu0 %v959
        %1099 = vmatpush1.msra.mxu0 %v958
        %1100 = vmatprep.subr.mxu0 %v961
        %1101 = vmatpush1.msra.mxu0 %v960
        %1102 = vmatprep.subr.mxu0 %v963
        %1103 = vmatpush1.msra.mxu0 %v962
        %1104 = vmatprep.subr.mxu0 %v965
        %1105 = vmatpush1.msra.mxu0 %v964
        %1106 = vmatprep.subr.mxu0 %v967
        %1107 = vmatpush1.msra.mxu0 %v966
        %1108 = vmatprep.subr.mxu0 %v969
        %1109 = vmatpush1.msra.mxu0 %v968
        %1110 = vmatprep.subr.mxu0 %v971
        %1111 = vmatpush1.msra.mxu0 %v970
        %1112 = vmatprep.subr.mxu0 %v973
        %1113 = vmatpush1.msra.mxu0 %v972
        %1114 = vmatprep.mubr.f32.mxu0 %v903
        %1115 = vmatmul.mubr.f32.gmra.mrb[0].mxu0 %v902
        %v1116 = vpop.f32.mrb[0].mxu0
        %v1117 = vadd.f32 %v1043, %v1116
        %v1118 = vpop.f32.mrb[0].mxu0
        %v1119 = vadd.f32 %v1047, %v1118
        %1120 = vmatprep.mubr.f32.mxu0 %v907
        %1121 = vmatmul.mubr.f32.gmra.mrb[0].mxu0 %v906
        %v1122 = vpop.f32.mrb[0].mxu0
        %v1123 = vadd.f32 %v1043, %v1122
        %v1124 = vpop.f32.mrb[0].mxu0
        %v1125 = vadd.f32 %v1047, %v1124
        %1126 = vdwg.mxu0
        %1127 = vmatprep.subr.mxu0 %v975
        %1128 = vmatpush1.msra.mxu0 %v974
        %1129 = vmatprep.subr.mxu0 %v977
        %1130 = vmatpush1.msra.mxu0 %v976
        %1131 = vmatprep.subr.mxu0 %v979
        %1132 = vmatpush1.msra.mxu0 %v978
        %1133 = vmatprep.subr.mxu0 %v981
        %1134 = vmatpush1.msra.mxu0 %v980
        %1135 = vmatprep.subr.mxu0 %v983
        %1136 = vmatpush1.msra.mxu0 %v982
        %1137 = vmatprep.subr.mxu0 %v985
        %1138 = vmatpush1.msra.mxu0 %v984
        %1139 = vmatprep.subr.mxu0 %v987
        %1140 = vmatpush1.msra.mxu0 %v986
        %1141 = vmatprep.subr.mxu0 %v989
        %1142 = vmatpush1.msra.mxu0 %v988
        %1143 = vmatprep.subr.mxu0 %v991
        %1144 = vmatpush1.msra.mxu0 %v990
        %1145 = vmatprep.subr.mxu0 %v993
        %1146 = vmatpush1.msra.mxu0 %v992
        %1147 = vmatprep.subr.mxu0 %v995
        %1148 = vmatpush1.msra.mxu0 %v994
        %1149 = vmatprep.subr.mxu0 %v997
        %1150 = vmatpush1.msra.mxu0 %v996
        %1151 = vmatprep.subr.mxu0 %v999
        %1152 = vmatpush1.msra.mxu0 %v998
        %1153 = vmatprep.subr.mxu0 %v1001
        %1154 = vmatpush1.msra.mxu0 %v1000
        %1155 = vmatprep.subr.mxu0 %v1003
        %1156 = vmatpush1.msra.mxu0 %v1002
        %1157 = vmatprep.subr.mxu0 %v1005
        %1158 = vmatpush1.msra.mxu0 %v1004
        %1159 = vmatprep.subr.mxu0 %v1007
        %1160 = vmatpush1.msra.mxu0 %v1006
        %1161 = vmatprep.subr.mxu0 %v1009
        %1162 = vmatpush1.msra.mxu0 %v1008
        %1163 = vmatprep.subr.mxu0 %v1011
        %1164 = vmatpush1.msra.mxu0 %v1010
        %1165 = vmatprep.subr.mxu0 %v1013
        %1166 = vmatpush1.msra.mxu0 %v1012
        %1167 = vmatprep.subr.mxu0 %v1015
        %1168 = vmatpush1.msra.mxu0 %v1014
        %1169 = vmatprep.subr.mxu0 %v1017
        %1170 = vmatpush1.msra.mxu0 %v1016
        %1171 = vmatprep.subr.mxu0 %v1019
        %1172 = vmatpush1.msra.mxu0 %v1018
        %1173 = vmatprep.subr.mxu0 %v1021
        %1174 = vmatpush1.msra.mxu0 %v1020
        %1175 = vmatprep.subr.mxu0 %v1023
        %1176 = vmatpush1.msra.mxu0 %v1022
        %1177 = vmatprep.subr.mxu0 %v1025
        %1178 = vmatpush1.msra.mxu0 %v1024
        %1179 = vmatprep.subr.mxu0 %v1027
        %1180 = vmatpush1.msra.mxu0 %v1026
        %1181 = vmatprep.subr.mxu0 %v1029
        %1182 = vmatpush1.msra.mxu0 %v1028
        %1183 = vmatprep.subr.mxu0 %v1031
        %1184 = vmatpush1.msra.mxu0 %v1030
        %1185 = vmatprep.subr.mxu0 %v1033
        %1186 = vmatpush1.msra.mxu0 %v1032
        %1187 = vmatprep.subr.mxu0 %v1035
        %1188 = vmatpush1.msra.mxu0 %v1034
        %1189 = vmatprep.subr.mxu0 %v1037
        %1190 = vmatpush1.msra.mxu0 %v1036
        %1191 = vmatprep.mubr.f32.mxu0 %v905
        %1192 = vmatmul.mubr.f32.gmra.mrb[0].mxu0 %v904
        %v1193 = vpop.f32.mrb[0].mxu0
        %v1194 = vadd.f32 %v1117, %v1193
        %v1195 = vpop.f32.mrb[0].mxu0
        %v1196 = vadd.f32 %v1119, %v1195
        %1197 = vmatprep.mubr.f32.mxu0 %v909
        %1198 = vmatmul.mubr.f32.gmra.mrb[0].mxu0 %v908
        %v1199 = vpop.f32.mrb[0].mxu0
        %v1200 = vadd.f32 %v1123, %v1199
        %v1201 = vpop.f32.mrb[0].mxu0
        %v1202 = vadd.f32 %v1125, %v1201
        %1203 = vdwg.mxu0
        %v1204 = vmax.f32 %v1194, 0.0
        %v1205 = vmax.f32 %v1196, 0.0
        %v1206 = vmax.f32 %v1200, 0.0
        %v1207 = vmax.f32 %v1202, 0.0
        %1208 = vst [vmem:[%s279] sm:$0xff] %v1204
        %1209 = vst [vmem:[%s279 + $0x8] sm:$0xff] %v1205
        %1210 = vst [vmem:[%s279 + $0x10] sm:$0xff] %v1206
        %1211 = vst [vmem:[%s279 + $0x18] sm:$0xff] %v1207
        %s1212 = sand.u32 %s141, 1
        %s1213 = scalar_lea.sflag [#allocation5], %s1212
        %s1214 = sand.u32 %s141, 1
        %s1215 = smul.addr %s1214, 32
        %s1216 = scalar_lea.vmem [#allocation9], %s1215
        // Predicated region
        $region53: #{tpu_custom_call.1} parent=39 // pred_check
          %p1217 = pneg %p151
        $region54: #{tpu_custom_call.1} parent=39 // pred_check_branch
          %1219 = sbr.rel (%p1217) target = $region56
        $region55: #{tpu_custom_call.1} parent=39 // pred_region
          %s1220 = smul.u32 2, %s23
          %s1221 = ssub.s32 5, %s1220
          %p1222 = scmp.lt.s32.totalorder %s1221, 2
          %s1223 = scalar_select %p1222, %s1221, 2
          %s1224 = smul.u32 128, %s1223
          %s1225 = smul.u32 %s1224, 2
          %s1227 = ssub.s32 512, %s1225
          %1228 = vsyncadd %s1213, %s1227
          %p1229 = scmp.ne.s32.totalorder 0, %s1225
          %s1230 = smul.addr %s1220, 2
          %s1231 = smul.addr %s1230, 128
          %s1232 = scalar_lea.hbm %s5, %s1231
          %s1233 = smul.u32 16, %s1223
          %s1234 = sshll.u32 %s1216, 4
          %s1235 = int_to_ptr.vmem [resolvable:$true] %s1234
          %s1236 = sshll.u32 %s1233, 4
          %1240 = dma.vmem_to_hbm [thread:$0]  (%p1229), %s1235, %s1236, %s1232, %s1213, 256, 256, 16
        $region56: #{tpu_custom_call.1} parent=39 // pred_fallthru
          _
      $region40: #{tpu_custom_call.1} parent=5 // pred_fallthru
        _
      %p1241 = scmp.le.s32.totalorder 2, %s18
      // Predicated region
      $region57: #{tpu_custom_call.1} parent=5 // pred_check
        %p1242 = pneg %p1241
      $region58: #{tpu_custom_call.1} parent=5 // pred_check_branch
        %1244 = sbr.rel (%p1242) target = $region60
      $region59: #{tpu_custom_call.1} parent=5 // pred_region
        %s1245 = ssub.s32 %s18, 2
        // Predicated region
        $region61: #{tpu_custom_call.1} parent=59 // pred_check
          %p1246 = pneg %p157
        $region62: #{tpu_custom_call.1} parent=59 // pred_check_branch
          %1248 = sbr.rel (%p1246) target = $region64
        $region63: #{tpu_custom_call.1} parent=59 // pred_region
          %s1249 = sand.u32 %s142, 1
          %s1250 = scalar_lea.sflag [#allocation5], %s1249
          %s1251 = sand.u32 %s142, 1
          %s1252 = smul.addr %s1251, 32
          %s1253 = scalar_lea.vmem [#allocation9], %s1252
          %1254 = dma.done %s1250, 512
        $region64: #{tpu_custom_call.1} parent=59 // pred_fallthru
          _
      $region60: #{tpu_custom_call.1} parent=5 // pred_fallthru
        _
    $region6: #{tpu_custom_call.1} parent=1 // loop_footer
      %s22 = sadd.s32 1, %s18
    $region7: #{tpu_custom_call.1} parent=1 // loop_footer_branch
      %17 = sbr.rel target = $region3
    $region8: #{tpu_custom_call.1} parent=1 // loop_exit
      _
    %1255 = vsyncpa [#allocation4], 1
    %s1256 = scalar_lea.sflag [#allocation4], 1
    %1257 = vsyncpa %s1256, 1
    %1258 = vsyncpa [#allocation7], 1
    %1259 = vsyncpa [#allocation5], 1
    %s1260 = scalar_lea.sflag [#allocation5], 1
    %1261 = vsyncpa %s1260, 1

</llo_original>
